<compile_context>
chip_gen: v6e
topology: v6e:2x2x1
jax: 0.10.0
libtpu: 0.0.40
codegen_flags: <defaults>
</compile_context>

<pallas_src>
import functools

import jax
import jax.numpy as jnp
from jax.experimental import pallas as pl
from jax.experimental.pallas import tpu as pltpu

PAD = 128  # lane-dense feature width for every padded matrix


# ----------------------------- fused kernel -----------------------------

def _fused_forward_kernel(eps1_ref,                       # SMEM [L]  = 1 + eps
                          x_ref, ea_ref,                  # [N,PAD], [E,PAD]
                          src_ref, dstT_ref,              # [E,N] bf16, [N,E] bf16
                          s1w1_ref, s1b1_ref, s1w2_ref, s1b2_ref,
                          s2w1_ref, s2b1_ref, s2w2_ref, s2b2_ref,
                          cw1_ref, cb1_ref, cw2_ref, cb2_ref,   # stacked [L,...]
                          g_ref, bta_ref,                 # BN gamma/beta [L,1,PAD]
                          o_ref,                          # [N,PAD]
                          *, num_layers, jk, residual, bn_eps):

    def mlp2(x, w1, b1, w2, b2):
        h = jnp.dot(x, w1, preferred_element_type=jnp.float32) + b1
        h = jnp.maximum(h, 0.0)
        return jnp.dot(h, w2, preferred_element_type=jnp.float32) + b2

    def batch_norm(x, gamma, beta, apply_relu):
        # BatchNorm1d, training mode (batch statistics, biased variance).
        # TODO(synk): eval-mode BN (running stats) not implemented.
        mean = jnp.mean(x, axis=0, keepdims=True)
        xc = x - mean
        var = jnp.mean(xc * xc, axis=0, keepdims=True)
        y = xc * jax.lax.rsqrt(var + bn_eps) * gamma + beta
        return jnp.maximum(y, 0.0) if apply_relu else y

    # Input feature / edge-attribute embeddings (sw1 / sw2).
    h = mlp2(x_ref[...], s1w1_ref[...], s1b1_ref[...], s1w2_ref[...], s1b2_ref[...])
    ea = mlp2(ea_ref[...], s2w1_ref[...], s2b1_ref[...], s2w2_ref[...], s2b2_ref[...])

    # One-hot gather/scatter operands (bf16 -> f32 up-cast is exact for 0/1).
    src = src_ref[...].astype(jnp.float32)     # [E, N]
    dstT = dstT_ref[...].astype(jnp.float32)   # [N, E]  (pre-transposed on host)

    jk_acc = h
    for layer in range(num_layers):            # unrolled: num_layers is static & small
        # GIN message passing:  msg = relu(h[src] + ea);  agg = scatter-add(msg)
        msg = jnp.dot(src, h, preferred_element_type=jnp.float32) + ea
        msg = jnp.maximum(msg, 0.0)
        agg = jnp.dot(dstT, msg, preferred_element_type=jnp.float32)
        m = eps1_ref[layer] * h + agg          # (1 + eps) * h + agg

        # Conv MLP, then fused BatchNorm (+ReLU on all but the last layer).
        hh = mlp2(m, cw1_ref[layer], cb1_ref[layer], cw2_ref[layer], cb2_ref[layer])
        hh = batch_norm(hh, g_ref[layer], bta_ref[layer],
                        apply_relu=(layer != num_layers - 1))
        # TODO(synk): F.dropout omitted -- exact only for drop_ratio=0 / eval mode.
        if residual:
            hh = hh + h
        h = hh
        if jk == 'sum':
            jk_acc = jk_acc + h

    out = h if jk == 'last' else jk_acc
    o_ref[...] = out.astype(o_ref.dtype)       # lane-dense [N, 128] store


# ----------------------------- wrapper -----------------------------

def node_embedding_forward(params, x, edge_index, edge_attr, *,
                           num_layers, emb_dim, JK='last', residual=False):
    if JK not in ('last', 'sum'):
        raise ValueError(JK)
    if 2 * emb_dim > PAD:
        raise ValueError("emb_dim too large for PAD=128 lane padding")
    n = x.shape[0]
    e = edge_index.shape[1]

    # Zero-pad raw features to the 128-lane width (exact: padded weights are 0).
    x_p = jnp.zeros((n, PAD), jnp.float32).at[:, :x.shape[1]].set(x)
    ea_p = jnp.zeros((e, PAD), jnp.float32).at[:, :edge_attr.shape[1]].set(edge_attr)

    # Gather one-hot [E, N] and scatter one-hot already transposed to [N, E].
    src_oh = jax.nn.one_hot(edge_index[0], n, dtype=jnp.bfloat16)                 # [E, N]
    dst_ohT = (jnp.arange(n, dtype=edge_index.dtype)[:, None]
               == edge_index[1][None, :]).astype(jnp.bfloat16)                    # [N, E]

    kernel = functools.partial(_fused_forward_kernel,
                               num_layers=num_layers, jk=JK,
                               residual=residual, bn_eps=1e-5)

    # Rough advisory cost estimate for the XLA scheduler.
    flops = (4 * n * PAD * PAD + 4 * e * PAD * PAD
             + num_layers * (2 * e * n * PAD + 2 * n * e * PAD + 4 * n * PAD * PAD))
    inputs = (params['one_plus_eps'], x_p, ea_p, src_oh, dst_ohT,
              params['s1w1'], params['s1b1'], params['s1w2'], params['s1b2'],
              params['s2w1'], params['s2b1'], params['s2w2'], params['s2b2'],
              params['cw1'], params['cb1'], params['cw2'], params['cb2'],
              params['gamma'], params['beta'])
    bytes_accessed = sum(int(a.size) * a.dtype.itemsize for a in inputs) + n * PAD * 4

    out_p = pl.pallas_call(
        kernel,
        out_shape=jax.ShapeDtypeStruct((n, PAD), jnp.float32),
        in_specs=[pl.BlockSpec(memory_space=pltpu.MemorySpace.SMEM)]      # 1+eps scalars
                 + [pl.BlockSpec(memory_space=pltpu.MemorySpace.VMEM)] * 18,
        out_specs=pl.BlockSpec(memory_space=pltpu.MemorySpace.VMEM),
        cost_estimate=pl.CostEstimate(flops=int(flops), transcendentals=0,
                                      bytes_accessed=int(bytes_accessed)),
    )(*inputs)

    return out_p[:, :emb_dim]


# ----------------------------- parameter init -----------------------------

def _linear_params(key, fan_in, fan_out):
    """PyTorch nn.Linear default init, zero-padded to [PAD, PAD] / [1, PAD]."""
    kw, kb = jax.random.split(key)
    bound = 1.0 / jnp.sqrt(jnp.asarray(fan_in, jnp.float32))
    w = jax.random.uniform(kw, (fan_in, fan_out), jnp.float32, -bound, bound)
    b = jax.random.uniform(kb, (fan_out,), jnp.float32, -bound, bound)
    w_p = jnp.zeros((PAD, PAD), jnp.float32).at[:fan_in, :fan_out].set(w)
    b_p = jnp.zeros((1, PAD), jnp.float32).at[0, :fan_out].set(b)
    return w_p, b_p


def init_params(key, num_layers, emb_dim):
    keys = jax.random.split(key, 4 + 2 * num_layers)
    s1w1, s1b1 = _linear_params(keys[0], 12, 27)
    s1w2, s1b2 = _linear_params(keys[1], 27, 32)
    s2w1, s2b1 = _linear_params(keys[2], 3, 9)
    s2w2, s2b2 = _linear_params(keys[3], 9, 32)

    cw1, cb1, cw2, cb2 = [], [], [], []
    for layer in range(num_layers):
        w1, b1 = _linear_params(keys[4 + 2 * layer], emb_dim, 2 * emb_dim)
        w2, b2 = _linear_params(keys[5 + 2 * layer], 2 * emb_dim, emb_dim)
        cw1.append(w1); cb1.append(b1); cw2.append(w2); cb2.append(b2)

    gamma = jnp.zeros((num_layers, 1, PAD), jnp.float32).at[:, :, :emb_dim].set(1.0)
    beta = jnp.zeros((num_layers, 1, PAD), jnp.float32)
    one_plus_eps = jnp.ones((num_layers,), jnp.float32)   # GIN eps init = 0 -> 1+eps = 1

    return dict(s1w1=s1w1, s1b1=s1b1, s1w2=s1w2, s1b2=s1b2,
                s2w1=s2w1, s2b1=s2b1, s2w2=s2w2, s2b2=s2b2,
                cw1=jnp.stack(cw1), cb1=jnp.stack(cb1),
                cw2=jnp.stack(cw2), cb2=jnp.stack(cb2),
                gamma=gamma, beta=beta, one_plus_eps=one_plus_eps)


# ----------------------------- main -----------------------------

if __name__ == "__main__":
    NUM_LAYERS = 2
    EMB_DIM = 32
    N_NODES = 16
    N_EDGES = 32

    key = jax.random.PRNGKey(0)
    kx, ke, ka, kp = jax.random.split(key, 4)

    x = jax.random.normal(kx, (N_NODES, 12), jnp.float32)
    edge_index = jax.random.randint(ke, (2, N_EDGES), 0, N_NODES, jnp.int32)
    edge_attr = jax.random.normal(ka, (N_EDGES, 3), jnp.float32)

    params = init_params(kp, NUM_LAYERS, EMB_DIM)

    out = node_embedding_forward(params, x, edge_index, edge_attr,
                                 num_layers=NUM_LAYERS, emb_dim=EMB_DIM,
                                 JK='last', residual=False)
    out = jax.block_until_ready(out)
    assert out.shape == (N_NODES, EMB_DIM)
    assert bool(jnp.all(jnp.isfinite(out)))
    print("KERNEL_OK")
</pallas_src>

<mosaic_0001>
module attributes {stable_mosaic.version = 11 : i64} {
  func.func @_fused_forward_kernel(%arg0: memref<2xf32, #tpu.memory_space<smem>>, %arg1: memref<16x128xf32, #tpu.memory_space<vmem>>, %arg2: memref<32x128xf32, #tpu.memory_space<vmem>>, %arg3: memref<32x16xbf16, #tpu.memory_space<vmem>>, %arg4: memref<16x32xbf16, #tpu.memory_space<vmem>>, %arg5: memref<128x128xf32, #tpu.memory_space<vmem>>, %arg6: memref<1x128xf32, #tpu.memory_space<vmem>>, %arg7: memref<128x128xf32, #tpu.memory_space<vmem>>, %arg8: memref<1x128xf32, #tpu.memory_space<vmem>>, %arg9: memref<128x128xf32, #tpu.memory_space<vmem>>, %arg10: memref<1x128xf32, #tpu.memory_space<vmem>>, %arg11: memref<128x128xf32, #tpu.memory_space<vmem>>, %arg12: memref<1x128xf32, #tpu.memory_space<vmem>>, %arg13: memref<2x128x128xf32, #tpu.memory_space<vmem>>, %arg14: memref<2x1x128xf32, #tpu.memory_space<vmem>>, %arg15: memref<2x128x128xf32, #tpu.memory_space<vmem>>, %arg16: memref<2x1x128xf32, #tpu.memory_space<vmem>>, %arg17: memref<2x1x128xf32, #tpu.memory_space<vmem>>, %arg18: memref<2x1x128xf32, #tpu.memory_space<vmem>>, %arg19: memref<16x128xf32, #tpu.memory_space<vmem>>) attributes {dimension_semantics = [], scalar_prefetch = 0 : i64, scratch_operands = 0 : i64, tpu.core_type = #tpu.core_type<tc>} {
    %c0 = arith.constant 0 : index
    %c0_0 = arith.constant 0 : index
    %0 = vector.load %arg1[%c0, %c0_0] : memref<16x128xf32, #tpu.memory_space<vmem>>, vector<16x128xf32>
    %c0_1 = arith.constant 0 : index
    %c0_2 = arith.constant 0 : index
    %1 = vector.load %arg5[%c0_1, %c0_2] : memref<128x128xf32, #tpu.memory_space<vmem>>, vector<128x128xf32>
    %c0_3 = arith.constant 0 : index
    %c0_4 = arith.constant 0 : index
    %2 = vector.load %arg6[%c0_3, %c0_4] : memref<1x128xf32, #tpu.memory_space<vmem>>, vector<1x128xf32>
    %c0_5 = arith.constant 0 : index
    %c0_6 = arith.constant 0 : index
    %3 = vector.load %arg7[%c0_5, %c0_6] : memref<128x128xf32, #tpu.memory_space<vmem>>, vector<128x128xf32>
    %c0_7 = arith.constant 0 : index
    %c0_8 = arith.constant 0 : index
    %4 = vector.load %arg8[%c0_7, %c0_8] : memref<1x128xf32, #tpu.memory_space<vmem>>, vector<1x128xf32>
    %cst = arith.constant dense<0.000000e+00> : vector<16x128xf32>
    %5 = tpu.matmul %0, %1, %cst {dimension_numbers = #tpu.dot_dimension_numbers<[1], [0], [0], [1], [0, 0, 1, 1], [], []>} : vector<16x128xf32>, vector<128x128xf32>, vector<16x128xf32> -> vector<16x128xf32>
    %6 = vector.broadcast %2 : vector<1x128xf32> to vector<16x128xf32>
    %7 = arith.addf %5, %6 : vector<16x128xf32>
    %cst_9 = arith.constant 0.000000e+00 : f32
    %8 = vector.broadcast %cst_9 : f32 to vector<16x128xf32>
    %9 = arith.maximumf %7, %8 : vector<16x128xf32>
    %cst_10 = arith.constant dense<0.000000e+00> : vector<16x128xf32>
    %10 = tpu.matmul %9, %3, %cst_10 {dimension_numbers = #tpu.dot_dimension_numbers<[1], [0], [0], [1], [0, 0, 1, 1], [], []>} : vector<16x128xf32>, vector<128x128xf32>, vector<16x128xf32> -> vector<16x128xf32>
    %11 = vector.broadcast %4 : vector<1x128xf32> to vector<16x128xf32>
    %12 = arith.addf %10, %11 : vector<16x128xf32>
    %c0_11 = arith.constant 0 : index
    %c0_12 = arith.constant 0 : index
    %13 = vector.load %arg2[%c0_11, %c0_12] : memref<32x128xf32, #tpu.memory_space<vmem>>, vector<32x128xf32>
    %c0_13 = arith.constant 0 : index
    %c0_14 = arith.constant 0 : index
    %14 = vector.load %arg9[%c0_13, %c0_14] : memref<128x128xf32, #tpu.memory_space<vmem>>, vector<128x128xf32>
    %c0_15 = arith.constant 0 : index
    %c0_16 = arith.constant 0 : index
    %15 = vector.load %arg10[%c0_15, %c0_16] : memref<1x128xf32, #tpu.memory_space<vmem>>, vector<1x128xf32>
    %c0_17 = arith.constant 0 : index
    %c0_18 = arith.constant 0 : index
    %16 = vector.load %arg11[%c0_17, %c0_18] : memref<128x128xf32, #tpu.memory_space<vmem>>, vector<128x128xf32>
    %c0_19 = arith.constant 0 : index
    %c0_20 = arith.constant 0 : index
    %17 = vector.load %arg12[%c0_19, %c0_20] : memref<1x128xf32, #tpu.memory_space<vmem>>, vector<1x128xf32>
    %cst_21 = arith.constant dense<0.000000e+00> : vector<32x128xf32>
    %18 = tpu.matmul %13, %14, %cst_21 {dimension_numbers = #tpu.dot_dimension_numbers<[1], [0], [0], [1], [0, 0, 1, 1], [], []>} : vector<32x128xf32>, vector<128x128xf32>, vector<32x128xf32> -> vector<32x128xf32>
    %19 = vector.broadcast %15 : vector<1x128xf32> to vector<32x128xf32>
    %20 = arith.addf %18, %19 : vector<32x128xf32>
    %cst_22 = arith.constant 0.000000e+00 : f32
    %21 = vector.broadcast %cst_22 : f32 to vector<32x128xf32>
    %22 = arith.maximumf %20, %21 : vector<32x128xf32>
    %cst_23 = arith.constant dense<0.000000e+00> : vector<32x128xf32>
    %23 = tpu.matmul %22, %16, %cst_23 {dimension_numbers = #tpu.dot_dimension_numbers<[1], [0], [0], [1], [0, 0, 1, 1], [], []>} : vector<32x128xf32>, vector<128x128xf32>, vector<32x128xf32> -> vector<32x128xf32>
    %24 = vector.broadcast %17 : vector<1x128xf32> to vector<32x128xf32>
    %25 = arith.addf %23, %24 : vector<32x128xf32>
    %c0_24 = arith.constant 0 : index
    %c0_25 = arith.constant 0 : index
    %26 = vector.load %arg3[%c0_24, %c0_25] : memref<32x16xbf16, #tpu.memory_space<vmem>>, vector<32x16xbf16>
    %27 = arith.extf %26 : vector<32x16xbf16> to vector<32x16xf32>
    %c0_26 = arith.constant 0 : index
    %c0_27 = arith.constant 0 : index
    %28 = vector.load %arg4[%c0_26, %c0_27] : memref<16x32xbf16, #tpu.memory_space<vmem>>, vector<16x32xbf16>
    %29 = arith.extf %28 : vector<16x32xbf16> to vector<16x32xf32>
    %cst_28 = arith.constant dense<0.000000e+00> : vector<32x128xf32>
    %30 = tpu.matmul %27, %12, %cst_28 {dimension_numbers = #tpu.dot_dimension_numbers<[1], [0], [0], [1], [0, 0, 1, 1], [], []>} : vector<32x16xf32>, vector<16x128xf32>, vector<32x128xf32> -> vector<32x128xf32>
    %31 = arith.addf %30, %25 : vector<32x128xf32>
    %cst_29 = arith.constant 0.000000e+00 : f32
    %32 = vector.broadcast %cst_29 : f32 to vector<32x128xf32>
    %33 = arith.maximumf %31, %32 : vector<32x128xf32>
    %cst_30 = arith.constant dense<0.000000e+00> : vector<16x128xf32>
    %34 = tpu.matmul %29, %33, %cst_30 {dimension_numbers = #tpu.dot_dimension_numbers<[1], [0], [0], [1], [0, 0, 1, 1], [], []>} : vector<16x32xf32>, vector<32x128xf32>, vector<16x128xf32> -> vector<16x128xf32>
    %c0_31 = arith.constant 0 : index
    %35 = memref.load %arg0[%c0_31] : memref<2xf32, #tpu.memory_space<smem>>
    %36 = vector.broadcast %35 : f32 to vector<16x128xf32>
    %37 = arith.mulf %36, %12 : vector<16x128xf32>
    %38 = arith.addf %37, %34 : vector<16x128xf32>
    %c0_32 = arith.constant 0 : index
    %c0_33 = arith.constant 0 : index
    %c0_34 = arith.constant 0 : index
    %39 = vector.load %arg13[%c0_32, %c0_33, %c0_34] : memref<2x128x128xf32, #tpu.memory_space<vmem>>, vector<1x128x128xf32>
    %40 = vector.shape_cast %39 : vector<1x128x128xf32> to vector<128x128xf32>
    %c0_35 = arith.constant 0 : index
    %c0_36 = arith.constant 0 : index
    %c0_37 = arith.constant 0 : index
    %41 = vector.load %arg14[%c0_35, %c0_36, %c0_37] : memref<2x1x128xf32, #tpu.memory_space<vmem>>, vector<1x1x128xf32>
    %42 = vector.shape_cast %41 : vector<1x1x128xf32> to vector<1x128xf32>
    %c0_38 = arith.constant 0 : index
    %c0_39 = arith.constant 0 : index
    %c0_40 = arith.constant 0 : index
    %43 = vector.load %arg15[%c0_38, %c0_39, %c0_40] : memref<2x128x128xf32, #tpu.memory_space<vmem>>, vector<1x128x128xf32>
    %44 = vector.shape_cast %43 : vector<1x128x128xf32> to vector<128x128xf32>
    %c0_41 = arith.constant 0 : index
    %c0_42 = arith.constant 0 : index
    %c0_43 = arith.constant 0 : index
    %45 = vector.load %arg16[%c0_41, %c0_42, %c0_43] : memref<2x1x128xf32, #tpu.memory_space<vmem>>, vector<1x1x128xf32>
    %46 = vector.shape_cast %45 : vector<1x1x128xf32> to vector<1x128xf32>
    %cst_44 = arith.constant dense<0.000000e+00> : vector<16x128xf32>
    %47 = tpu.matmul %38, %40, %cst_44 {dimension_numbers = #tpu.dot_dimension_numbers<[1], [0], [0], [1], [0, 0, 1, 1], [], []>} : vector<16x128xf32>, vector<128x128xf32>, vector<16x128xf32> -> vector<16x128xf32>
    %48 = vector.broadcast %42 : vector<1x128xf32> to vector<16x128xf32>
    %49 = arith.addf %47, %48 : vector<16x128xf32>
    %cst_45 = arith.constant 0.000000e+00 : f32
    %50 = vector.broadcast %cst_45 : f32 to vector<16x128xf32>
    %51 = arith.maximumf %49, %50 : vector<16x128xf32>
    %cst_46 = arith.constant dense<0.000000e+00> : vector<16x128xf32>
    %52 = tpu.matmul %51, %44, %cst_46 {dimension_numbers = #tpu.dot_dimension_numbers<[1], [0], [0], [1], [0, 0, 1, 1], [], []>} : vector<16x128xf32>, vector<128x128xf32>, vector<16x128xf32> -> vector<16x128xf32>
    %53 = vector.broadcast %46 : vector<1x128xf32> to vector<16x128xf32>
    %54 = arith.addf %52, %53 : vector<16x128xf32>
    %c0_47 = arith.constant 0 : index
    %c0_48 = arith.constant 0 : index
    %c0_49 = arith.constant 0 : index
    %55 = vector.load %arg17[%c0_47, %c0_48, %c0_49] : memref<2x1x128xf32, #tpu.memory_space<vmem>>, vector<1x1x128xf32>
    %56 = vector.shape_cast %55 : vector<1x1x128xf32> to vector<1x128xf32>
    %c0_50 = arith.constant 0 : index
    %c0_51 = arith.constant 0 : index
    %c0_52 = arith.constant 0 : index
    %57 = vector.load %arg18[%c0_50, %c0_51, %c0_52] : memref<2x1x128xf32, #tpu.memory_space<vmem>>, vector<1x1x128xf32>
    %58 = vector.shape_cast %57 : vector<1x1x128xf32> to vector<1x128xf32>
    %cst_53 = arith.constant dense<0.000000e+00> : vector<128xf32>
    %59 = vector.multi_reduction <add>, %54, %cst_53 [0] : vector<16x128xf32> to vector<128xf32>
    %60 = vector.shape_cast %59 : vector<128xf32> to vector<1x128xf32>
    %cst_54 = arith.constant 1.600000e+01 : f32
    %61 = vector.broadcast %cst_54 : f32 to vector<1x128xf32>
    %62 = arith.divf %60, %61 : vector<1x128xf32>
    %63 = vector.broadcast %62 : vector<1x128xf32> to vector<16x128xf32>
    %64 = arith.subf %54, %63 : vector<16x128xf32>
    %65 = arith.mulf %64, %64 : vector<16x128xf32>
    %cst_55 = arith.constant dense<0.000000e+00> : vector<128xf32>
    %66 = vector.multi_reduction <add>, %65, %cst_55 [0] : vector<16x128xf32> to vector<128xf32>
    %67 = vector.shape_cast %66 : vector<128xf32> to vector<1x128xf32>
    %cst_56 = arith.constant 1.600000e+01 : f32
    %68 = vector.broadcast %cst_56 : f32 to vector<1x128xf32>
    %69 = arith.divf %67, %68 : vector<1x128xf32>
    %cst_57 = arith.constant 9.99999974E-6 : f32
    %70 = vector.broadcast %cst_57 : f32 to vector<1x128xf32>
    %71 = arith.addf %69, %70 : vector<1x128xf32>
    %72 = math.rsqrt %71 : vector<1x128xf32>
    %73 = vector.broadcast %72 : vector<1x128xf32> to vector<16x128xf32>
    %74 = arith.mulf %64, %73 : vector<16x128xf32>
    %75 = vector.broadcast %56 : vector<1x128xf32> to vector<16x128xf32>
    %76 = arith.mulf %74, %75 : vector<16x128xf32>
    %77 = vector.broadcast %58 : vector<1x128xf32> to vector<16x128xf32>
    %78 = arith.addf %76, %77 : vector<16x128xf32>
    %cst_58 = arith.constant 0.000000e+00 : f32
    %79 = vector.broadcast %cst_58 : f32 to vector<16x128xf32>
    %80 = arith.maximumf %78, %79 : vector<16x128xf32>
    %cst_59 = arith.constant dense<0.000000e+00> : vector<32x128xf32>
    %81 = tpu.matmul %27, %80, %cst_59 {dimension_numbers = #tpu.dot_dimension_numbers<[1], [0], [0], [1], [0, 0, 1, 1], [], []>} : vector<32x16xf32>, vector<16x128xf32>, vector<32x128xf32> -> vector<32x128xf32>
    %82 = arith.addf %81, %25 : vector<32x128xf32>
    %cst_60 = arith.constant 0.000000e+00 : f32
    %83 = vector.broadcast %cst_60 : f32 to vector<32x128xf32>
    %84 = arith.maximumf %82, %83 : vector<32x128xf32>
    %cst_61 = arith.constant dense<0.000000e+00> : vector<16x128xf32>
    %85 = tpu.matmul %29, %84, %cst_61 {dimension_numbers = #tpu.dot_dimension_numbers<[1], [0], [0], [1], [0, 0, 1, 1], [], []>} : vector<16x32xf32>, vector<32x128xf32>, vector<16x128xf32> -> vector<16x128xf32>
    %c1 = arith.constant 1 : index
    %86 = memref.load %arg0[%c1] : memref<2xf32, #tpu.memory_space<smem>>
    %87 = vector.broadcast %86 : f32 to vector<16x128xf32>
    %88 = arith.mulf %87, %80 : vector<16x128xf32>
    %89 = arith.addf %88, %85 : vector<16x128xf32>
    %c1_62 = arith.constant 1 : index
    %c0_63 = arith.constant 0 : index
    %c0_64 = arith.constant 0 : index
    %90 = vector.load %arg13[%c1_62, %c0_63, %c0_64] : memref<2x128x128xf32, #tpu.memory_space<vmem>>, vector<1x128x128xf32>
    %91 = vector.shape_cast %90 : vector<1x128x128xf32> to vector<128x128xf32>
    %c1_65 = arith.constant 1 : index
    %c0_66 = arith.constant 0 : index
    %c0_67 = arith.constant 0 : index
    %92 = vector.load %arg14[%c1_65, %c0_66, %c0_67] : memref<2x1x128xf32, #tpu.memory_space<vmem>>, vector<1x1x128xf32>
    %93 = vector.shape_cast %92 : vector<1x1x128xf32> to vector<1x128xf32>
    %c1_68 = arith.constant 1 : index
    %c0_69 = arith.constant 0 : index
    %c0_70 = arith.constant 0 : index
    %94 = vector.load %arg15[%c1_68, %c0_69, %c0_70] : memref<2x128x128xf32, #tpu.memory_space<vmem>>, vector<1x128x128xf32>
    %95 = vector.shape_cast %94 : vector<1x128x128xf32> to vector<128x128xf32>
    %c1_71 = arith.constant 1 : index
    %c0_72 = arith.constant 0 : index
    %c0_73 = arith.constant 0 : index
    %96 = vector.load %arg16[%c1_71, %c0_72, %c0_73] : memref<2x1x128xf32, #tpu.memory_space<vmem>>, vector<1x1x128xf32>
    %97 = vector.shape_cast %96 : vector<1x1x128xf32> to vector<1x128xf32>
    %cst_74 = arith.constant dense<0.000000e+00> : vector<16x128xf32>
    %98 = tpu.matmul %89, %91, %cst_74 {dimension_numbers = #tpu.dot_dimension_numbers<[1], [0], [0], [1], [0, 0, 1, 1], [], []>} : vector<16x128xf32>, vector<128x128xf32>, vector<16x128xf32> -> vector<16x128xf32>
    %99 = vector.broadcast %93 : vector<1x128xf32> to vector<16x128xf32>
    %100 = arith.addf %98, %99 : vector<16x128xf32>
    %cst_75 = arith.constant 0.000000e+00 : f32
    %101 = vector.broadcast %cst_75 : f32 to vector<16x128xf32>
    %102 = arith.maximumf %100, %101 : vector<16x128xf32>
    %cst_76 = arith.constant dense<0.000000e+00> : vector<16x128xf32>
    %103 = tpu.matmul %102, %95, %cst_76 {dimension_numbers = #tpu.dot_dimension_numbers<[1], [0], [0], [1], [0, 0, 1, 1], [], []>} : vector<16x128xf32>, vector<128x128xf32>, vector<16x128xf32> -> vector<16x128xf32>
    %104 = vector.broadcast %97 : vector<1x128xf32> to vector<16x128xf32>
    %105 = arith.addf %103, %104 : vector<16x128xf32>
    %c1_77 = arith.constant 1 : index
    %c0_78 = arith.constant 0 : index
    %c0_79 = arith.constant 0 : index
    %106 = vector.load %arg17[%c1_77, %c0_78, %c0_79] : memref<2x1x128xf32, #tpu.memory_space<vmem>>, vector<1x1x128xf32>
    %107 = vector.shape_cast %106 : vector<1x1x128xf32> to vector<1x128xf32>
    %c1_80 = arith.constant 1 : index
    %c0_81 = arith.constant 0 : index
    %c0_82 = arith.constant 0 : index
    %108 = vector.load %arg18[%c1_80, %c0_81, %c0_82] : memref<2x1x128xf32, #tpu.memory_space<vmem>>, vector<1x1x128xf32>
    %109 = vector.shape_cast %108 : vector<1x1x128xf32> to vector<1x128xf32>
    %cst_83 = arith.constant dense<0.000000e+00> : vector<128xf32>
    %110 = vector.multi_reduction <add>, %105, %cst_83 [0] : vector<16x128xf32> to vector<128xf32>
    %111 = vector.shape_cast %110 : vector<128xf32> to vector<1x128xf32>
    %cst_84 = arith.constant 1.600000e+01 : f32
    %112 = vector.broadcast %cst_84 : f32 to vector<1x128xf32>
    %113 = arith.divf %111, %112 : vector<1x128xf32>
    %114 = vector.broadcast %113 : vector<1x128xf32> to vector<16x128xf32>
    %115 = arith.subf %105, %114 : vector<16x128xf32>
    %116 = arith.mulf %115, %115 : vector<16x128xf32>
    %cst_85 = arith.constant dense<0.000000e+00> : vector<128xf32>
    %117 = vector.multi_reduction <add>, %116, %cst_85 [0] : vector<16x128xf32> to vector<128xf32>
    %118 = vector.shape_cast %117 : vector<128xf32> to vector<1x128xf32>
    %cst_86 = arith.constant 1.600000e+01 : f32
    %119 = vector.broadcast %cst_86 : f32 to vector<1x128xf32>
    %120 = arith.divf %118, %119 : vector<1x128xf32>
    %cst_87 = arith.constant 9.99999974E-6 : f32
    %121 = vector.broadcast %cst_87 : f32 to vector<1x128xf32>
    %122 = arith.addf %120, %121 : vector<1x128xf32>
    %123 = math.rsqrt %122 : vector<1x128xf32>
    %124 = vector.broadcast %123 : vector<1x128xf32> to vector<16x128xf32>
    %125 = arith.mulf %115, %124 : vector<16x128xf32>
    %126 = vector.broadcast %107 : vector<1x128xf32> to vector<16x128xf32>
    %127 = arith.mulf %125, %126 : vector<16x128xf32>
    %128 = vector.broadcast %109 : vector<1x128xf32> to vector<16x128xf32>
    %129 = arith.addf %127, %128 : vector<16x128xf32>
    %c0_88 = arith.constant 0 : index
    %c0_89 = arith.constant 0 : index
    %130 = vector.load %arg19[%c0_88, %c0_89] : memref<16x128xf32, #tpu.memory_space<vmem>>, vector<16x128xf32>
    tpu.vector_store %arg19[%c0_88, %c0_89], %129 {strides = array<i32>} : memref<16x128xf32, #tpu.memory_space<vmem>>, vector<16x128xf32>,
    return
  }
}

</mosaic_0001>

<llo_original>
// kernel: tpu_custom_call.1
$region0: #{tpu_custom_call.1}
  #allocation0 [shape = 'u32[]', space=smem, size = 0x4, offset = 0x4, fixed_abs, tag = 'smem constant byte address 0x4 - core index']
  #allocation1 [shape = 'u32[144,128]{1,0:T(1,128)}', space=vmem, size = 0x12000, scoped, tag = 'internal scratch']
  %s0 = inlined_call_operand.vmem [shape: f32[2], index: 0, kind: input, shape index: {}]
  %s1 = inlined_call_operand.vmem [shape: f32[16,128], index: 1, kind: input, shape index: {}]
  %s2 = inlined_call_operand.hbm [shape: f32[32,128], index: 2, kind: input, shape index: {}]
  %s3 = inlined_call_operand.vmem [shape: bf16[32,16], index: 3, kind: input, shape index: {}]
  %s4 = inlined_call_operand.vmem [shape: bf16[16,32], index: 4, kind: input, shape index: {}]
  %s5 = inlined_call_operand.hbm [shape: f32[128,128], index: 5, kind: input, shape index: {}]
  %s6 = inlined_call_operand.vmem [shape: f32[1,128], index: 6, kind: input, shape index: {}]
  %s7 = inlined_call_operand.hbm [shape: f32[128,128], index: 7, kind: input, shape index: {}]
  %s8 = inlined_call_operand.vmem [shape: f32[1,128], index: 8, kind: input, shape index: {}]
  %s9 = inlined_call_operand.hbm [shape: f32[128,128], index: 9, kind: input, shape index: {}]
  %s10 = inlined_call_operand.vmem [shape: f32[1,128], index: 10, kind: input, shape index: {}]
  %s11 = inlined_call_operand.hbm [shape: f32[128,128], index: 11, kind: input, shape index: {}]
  %s12 = inlined_call_operand.vmem [shape: f32[1,128], index: 12, kind: input, shape index: {}]
  %s13 = inlined_call_operand.hbm [shape: f32[2,128,128], index: 13, kind: input, shape index: {}]
  %s14 = inlined_call_operand.vmem [shape: f32[2,1,128], index: 14, kind: input, shape index: {}]
  %s15 = inlined_call_operand.hbm [shape: f32[2,128,128], index: 15, kind: input, shape index: {}]
  %s16 = inlined_call_operand.vmem [shape: f32[2,1,128], index: 16, kind: input, shape index: {}]
  %s17 = inlined_call_operand.vmem [shape: f32[2,1,128], index: 17, kind: input, shape index: {}]
  %s18 = inlined_call_operand.vmem [shape: f32[2,1,128], index: 18, kind: input, shape index: {}]
  %s19 = inlined_call_operand.hbm [shape: f32[16,128], index: 19, kind: output, shape index: {}]
  %s20 = sld [smem:[#allocation0]]
  $region118: #{tpu_custom_call.1} parent=0
    _
  %s22 = ssub.s32 1, %s20
  %s23 = scalar_select 0, %s22, %s20
  $region1: #{tpu_custom_call.1} parent=0
    #allocation2 [shape = 'u8[512]{0}', space=smem, size = 0x200, scoped, tag = 'input window, operand 0, single buffered']
    #allocation3 [shape = 's32[1]{0}', space=sflag, size = 0x4, scoped, tag = 'scoped memory for tpu_custom_call.1']
    #allocation4 [shape = 's32[1]{0}', space=sflag, size = 0x4, scoped, tag = 'scoped memory for tpu_custom_call.1']
    #allocation5 [shape = 's32[1]{0}', space=sflag, size = 0x4, scoped, tag = 'scoped memory for tpu_custom_call.1']
    #allocation6 [shape = 'u8[16384]{0}', space=vmem, size = 0x4000, scoped, tag = 'input window, operand 2, single buffered']
    #allocation7 [shape = 'u8[65536]{0}', space=vmem, size = 0x10000, scoped, tag = 'input window, operand 5, single buffered']
    #allocation8 [shape = 's32[1]{0}', space=sflag, size = 0x4, scoped, tag = 'scoped memory for tpu_custom_call.1']
    #allocation9 [shape = 'u8[65536]{0}', space=vmem, size = 0x10000, scoped, tag = 'input window, operand 7, single buffered']
    #allocation10 [shape = 'u8[65536]{0}', space=vmem, size = 0x10000, scoped, tag = 'input window, operand 9, single buffered']
    #allocation11 [shape = 's32[1]{0}', space=sflag, size = 0x4, scoped, tag = 'scoped memory for tpu_custom_call.1']
    #allocation12 [shape = 'u8[65536]{0}', space=vmem, size = 0x10000, scoped, tag = 'input window, operand 11, single buffered']
    #allocation13 [shape = 'u8[131072]{0}', space=vmem, size = 0x20000, scoped, tag = 'input window, operand 13, single buffered']
    #allocation14 [shape = 's32[1]{0}', space=sflag, size = 0x4, scoped, tag = 'scoped memory for tpu_custom_call.1']
    #allocation15 [shape = 'u8[131072]{0}', space=vmem, size = 0x20000, scoped, tag = 'input window, operand 15, single buffered']
    #allocation16 [shape = 'u8[8192]{0}', space=vmem, size = 0x2000, scoped, tag = 'output window, operand 0, single buffered']
    %24 = vsyncpa [#allocation5], 0
    %25 = vsyncpa [#allocation3], 0
    %26 = vsyncpa [#allocation8], 0
    %27 = vsyncpa [#allocation11], 0
    %28 = vsyncpa [#allocation14], 0
    %29 = vsyncpa [#allocation4], 0
    // Predicated region
    $region2: #{tpu_custom_call.1} parent=1 // pred_check
      _
    $region3: #{tpu_custom_call.1} parent=1 // pred_check_branch
      %31 = sbr.rel (0) target = $region5
    $region4: #{tpu_custom_call.1} parent=1 // pred_region
      %s33 = ssub.s32 16, 16
      %34 = vsyncadd [#allocation5], %s33
      %s36 = sshll.u32 %s0, 4
      %s37 = int_to_ptr.vmem [resolvable:$true] %s36
      %39 = dma.vmem_to_smem %s37, 16, [#allocation2], [#allocation5]
    $region5: #{tpu_custom_call.1} parent=1 // pred_fallthru
      _
    // Predicated region
    $region6: #{tpu_custom_call.1} parent=1 // pred_check
      _
    $region7: #{tpu_custom_call.1} parent=1 // pred_check_branch
      %41 = sbr.rel (0) target = $region9
    $region8: #{tpu_custom_call.1} parent=1 // pred_region
      _
    $region9: #{tpu_custom_call.1} parent=1 // pred_fallthru
      _
    // Predicated region
    $region10: #{tpu_custom_call.1} parent=1 // pred_check
      _
    $region11: #{tpu_custom_call.1} parent=1 // pred_check_branch
      %43 = sbr.rel (0) target = $region13
    $region12: #{tpu_custom_call.1} parent=1 // pred_region
      %s45 = ssub.s32 512, 512
      %46 = vsyncadd [#allocation3], %s45
      %s47 = sshll.u32 [#allocation6], 4
      %s48 = int_to_ptr.vmem [resolvable:$true] %s47
      %53 = dma.hbm_to_vmem [thread:$0]  %s2, 512, %s48, [#allocation3], 128, 128, 8
    $region13: #{tpu_custom_call.1} parent=1 // pred_fallthru
      _
    // Predicated region
    $region14: #{tpu_custom_call.1} parent=1 // pred_check
      _
    $region15: #{tpu_custom_call.1} parent=1 // pred_check_branch
      %55 = sbr.rel (0) target = $region17
    $region16: #{tpu_custom_call.1} parent=1 // pred_region
      _
    $region17: #{tpu_custom_call.1} parent=1 // pred_fallthru
      _
    // Predicated region
    $region18: #{tpu_custom_call.1} parent=1 // pred_check
      _
    $region19: #{tpu_custom_call.1} parent=1 // pred_check_branch
      %57 = sbr.rel (0) target = $region21
    $region20: #{tpu_custom_call.1} parent=1 // pred_region
      _
    $region21: #{tpu_custom_call.1} parent=1 // pred_fallthru
      _
    // Predicated region
    $region22: #{tpu_custom_call.1} parent=1 // pred_check
      _
    $region23: #{tpu_custom_call.1} parent=1 // pred_check_branch
      %59 = sbr.rel (0) target = $region25
    $region24: #{tpu_custom_call.1} parent=1 // pred_region
      %s61 = ssub.s32 2048, 2048
      %62 = vsyncadd [#allocation8], %s61
      %s63 = sshll.u32 [#allocation7], 4
      %s64 = int_to_ptr.vmem [resolvable:$true] %s63
      %69 = dma.hbm_to_vmem [thread:$0]  %s5, 2048, %s64, [#allocation8], 128, 128, 8
    $region25: #{tpu_custom_call.1} parent=1 // pred_fallthru
      _
    // Predicated region
    $region26: #{tpu_custom_call.1} parent=1 // pred_check
      _
    $region27: #{tpu_custom_call.1} parent=1 // pred_check_branch
      %71 = sbr.rel (0) target = $region29
    $region28: #{tpu_custom_call.1} parent=1 // pred_region
      _
    $region29: #{tpu_custom_call.1} parent=1 // pred_fallthru
      _
    // Predicated region
    $region30: #{tpu_custom_call.1} parent=1 // pred_check
      _
    $region31: #{tpu_custom_call.1} parent=1 // pred_check_branch
      %73 = sbr.rel (0) target = $region33
    $region32: #{tpu_custom_call.1} parent=1 // pred_region
      %s75 = ssub.s32 2048, 2048
      %76 = vsyncadd [#allocation8], %s75
      %s77 = sshll.u32 [#allocation9], 4
      %s78 = int_to_ptr.vmem [resolvable:$true] %s77
      %83 = dma.hbm_to_vmem [thread:$0]  %s7, 2048, %s78, [#allocation8], 128, 128, 8
    $region33: #{tpu_custom_call.1} parent=1 // pred_fallthru
      _
    // Predicated region
    $region34: #{tpu_custom_call.1} parent=1 // pred_check
      _
    $region35: #{tpu_custom_call.1} parent=1 // pred_check_branch
      %85 = sbr.rel (0) target = $region37
    $region36: #{tpu_custom_call.1} parent=1 // pred_region
      _
    $region37: #{tpu_custom_call.1} parent=1 // pred_fallthru
      _
    // Predicated region
    $region38: #{tpu_custom_call.1} parent=1 // pred_check
      _
    $region39: #{tpu_custom_call.1} parent=1 // pred_check_branch
      %87 = sbr.rel (0) target = $region41
    $region40: #{tpu_custom_call.1} parent=1 // pred_region
      %s89 = ssub.s32 2048, 2048
      %90 = vsyncadd [#allocation11], %s89
      %s91 = sshll.u32 [#allocation10], 4
      %s92 = int_to_ptr.vmem [resolvable:$true] %s91
      %97 = dma.hbm_to_vmem [thread:$0]  %s9, 2048, %s92, [#allocation11], 128, 128, 8
    $region41: #{tpu_custom_call.1} parent=1 // pred_fallthru
      _
    // Predicated region
    $region42: #{tpu_custom_call.1} parent=1 // pred_check
      _
    $region43: #{tpu_custom_call.1} parent=1 // pred_check_branch
      %99 = sbr.rel (0) target = $region45
    $region44: #{tpu_custom_call.1} parent=1 // pred_region
      _
    $region45: #{tpu_custom_call.1} parent=1 // pred_fallthru
      _
    // Predicated region
    $region46: #{tpu_custom_call.1} parent=1 // pred_check
      _
    $region47: #{tpu_custom_call.1} parent=1 // pred_check_branch
      %101 = sbr.rel (0) target = $region49
    $region48: #{tpu_custom_call.1} parent=1 // pred_region
      %s103 = ssub.s32 2048, 2048
      %104 = vsyncadd [#allocation11], %s103
      %s105 = sshll.u32 [#allocation12], 4
      %s106 = int_to_ptr.vmem [resolvable:$true] %s105
      %111 = dma.hbm_to_vmem [thread:$0]  %s11, 2048, %s106, [#allocation11], 128, 128, 8
    $region49: #{tpu_custom_call.1} parent=1 // pred_fallthru
      _
    // Predicated region
    $region50: #{tpu_custom_call.1} parent=1 // pred_check
      _
    $region51: #{tpu_custom_call.1} parent=1 // pred_check_branch
      %113 = sbr.rel (0) target = $region53
    $region52: #{tpu_custom_call.1} parent=1 // pred_region
      _
    $region53: #{tpu_custom_call.1} parent=1 // pred_fallthru
      _
    // Predicated region
    $region54: #{tpu_custom_call.1} parent=1 // pred_check
      _
    $region55: #{tpu_custom_call.1} parent=1 // pred_check_branch
      %115 = sbr.rel (0) target = $region57
    $region56: #{tpu_custom_call.1} parent=1 // pred_region
      %s117 = ssub.s32 4096, 4096
      %118 = vsyncadd [#allocation14], %s117
      %s119 = sshll.u32 [#allocation13], 4
      %s120 = int_to_ptr.vmem [resolvable:$true] %s119
      %125 = dma.hbm_to_vmem [thread:$0]  %s13, 4096, %s120, [#allocation14], 128, 128, 8
    $region57: #{tpu_custom_call.1} parent=1 // pred_fallthru
      _
    // Predicated region
    $region58: #{tpu_custom_call.1} parent=1 // pred_check
      _
    $region59: #{tpu_custom_call.1} parent=1 // pred_check_branch
      %127 = sbr.rel (0) target = $region61
    $region60: #{tpu_custom_call.1} parent=1 // pred_region
      _
    $region61: #{tpu_custom_call.1} parent=1 // pred_fallthru
      _
    // Predicated region
    $region62: #{tpu_custom_call.1} parent=1 // pred_check
      _
    $region63: #{tpu_custom_call.1} parent=1 // pred_check_branch
      %129 = sbr.rel (0) target = $region65
    $region64: #{tpu_custom_call.1} parent=1 // pred_region
      %s131 = ssub.s32 4096, 4096
      %132 = vsyncadd [#allocation14], %s131
      %s133 = sshll.u32 [#allocation15], 4
      %s134 = int_to_ptr.vmem [resolvable:$true] %s133
      %139 = dma.hbm_to_vmem [thread:$0]  %s15, 4096, %s134, [#allocation14], 128, 128, 8
    $region65: #{tpu_custom_call.1} parent=1 // pred_fallthru
      _
    // Predicated region
    $region66: #{tpu_custom_call.1} parent=1 // pred_check
      _
    $region67: #{tpu_custom_call.1} parent=1 // pred_check_branch
      %141 = sbr.rel (0) target = $region69
    $region68: #{tpu_custom_call.1} parent=1 // pred_region
      _
    $region69: #{tpu_custom_call.1} parent=1 // pred_fallthru
      _
    // Predicated region
    $region70: #{tpu_custom_call.1} parent=1 // pred_check
      _
    $region71: #{tpu_custom_call.1} parent=1 // pred_check_branch
      %143 = sbr.rel (0) target = $region73
    $region72: #{tpu_custom_call.1} parent=1 // pred_region
      _
    $region73: #{tpu_custom_call.1} parent=1 // pred_fallthru
      _
    // Predicated region
    $region74: #{tpu_custom_call.1} parent=1 // pred_check
      _
    $region75: #{tpu_custom_call.1} parent=1 // pred_check_branch
      %145 = sbr.rel (0) target = $region77
    $region76: #{tpu_custom_call.1} parent=1 // pred_region
      _
    $region77: #{tpu_custom_call.1} parent=1 // pred_fallthru
      _
    // Predicated region
    $region78: #{tpu_custom_call.1} parent=1 // pred_check
      _
    $region79: #{tpu_custom_call.1} parent=1 // pred_check_branch
      %147 = sbr.rel (0) target = $region81
    $region80: #{tpu_custom_call.1} parent=1 // pred_region
      %148 = dma.done [#allocation5], 16
    $region81: #{tpu_custom_call.1} parent=1 // pred_fallthru
      _
    // Predicated region
    $region82: #{tpu_custom_call.1} parent=1 // pred_check
      _
    $region83: #{tpu_custom_call.1} parent=1 // pred_check_branch
      %150 = sbr.rel (0) target = $region85
    $region84: #{tpu_custom_call.1} parent=1 // pred_region
      %151 = dma.done [#allocation3], 512
    $region85: #{tpu_custom_call.1} parent=1 // pred_fallthru
      _
    // Predicated region
    $region86: #{tpu_custom_call.1} parent=1 // pred_check
      _
    $region87: #{tpu_custom_call.1} parent=1 // pred_check_branch
      %153 = sbr.rel (0) target = $region89
    $region88: #{tpu_custom_call.1} parent=1 // pred_region
      %154 = dma.done [#allocation8], 2048
    $region89: #{tpu_custom_call.1} parent=1 // pred_fallthru
      _
    // Predicated region
    $region90: #{tpu_custom_call.1} parent=1 // pred_check
      _
    $region91: #{tpu_custom_call.1} parent=1 // pred_check_branch
      %156 = sbr.rel (0) target = $region93
    $region92: #{tpu_custom_call.1} parent=1 // pred_region
      %157 = dma.done [#allocation8], 2048
    $region93: #{tpu_custom_call.1} parent=1 // pred_fallthru
      _
    // Predicated region
    $region94: #{tpu_custom_call.1} parent=1 // pred_check
      _
    $region95: #{tpu_custom_call.1} parent=1 // pred_check_branch
      %159 = sbr.rel (0) target = $region97
    $region96: #{tpu_custom_call.1} parent=1 // pred_region
      %160 = dma.done [#allocation11], 2048
    $region97: #{tpu_custom_call.1} parent=1 // pred_fallthru
      _
    // Predicated region
    $region98: #{tpu_custom_call.1} parent=1 // pred_check
      _
    $region99: #{tpu_custom_call.1} parent=1 // pred_check_branch
      %162 = sbr.rel (0) target = $region101
    $region100: #{tpu_custom_call.1} parent=1 // pred_region
      %163 = dma.done [#allocation11], 2048
    $region101: #{tpu_custom_call.1} parent=1 // pred_fallthru
      _
    // Predicated region
    $region102: #{tpu_custom_call.1} parent=1 // pred_check
      _
    $region103: #{tpu_custom_call.1} parent=1 // pred_check_branch
      %165 = sbr.rel (0) target = $region105
    $region104: #{tpu_custom_call.1} parent=1 // pred_region
      %166 = dma.done [#allocation14], 4096
    $region105: #{tpu_custom_call.1} parent=1 // pred_fallthru
      _
    // Predicated region
    $region106: #{tpu_custom_call.1} parent=1 // pred_check
      _
    $region107: #{tpu_custom_call.1} parent=1 // pred_check_branch
      %168 = sbr.rel (0) target = $region109
    $region108: #{tpu_custom_call.1} parent=1 // pred_region
      %169 = dma.done [#allocation14], 4096
    $region109: #{tpu_custom_call.1} parent=1 // pred_fallthru
      _
    %170 = sfence
    %v171 = vld [vmem:[%s1] sm:$0xff]
    %v172 = vld [vmem:[%s1 + $0x8] sm:$0xff]
    %v173 = vld [vmem:[#allocation7] sm:$0xff]
    %v174 = vld [vmem:[#allocation7 + $0x8] sm:$0xff]
    %v175 = vld [vmem:[#allocation7 + $0x10] sm:$0xff]
    %v176 = vld [vmem:[#allocation7 + $0x18] sm:$0xff]
    %v177 = vld [vmem:[#allocation7 + $0x20] sm:$0xff]
    %v178 = vld [vmem:[#allocation7 + $0x28] sm:$0xff]
    %v179 = vld [vmem:[#allocation7 + $0x30] sm:$0xff]
    %v180 = vld [vmem:[#allocation7 + $0x38] sm:$0xff]
    %v181 = vld [vmem:[#allocation7 + $0x40] sm:$0xff]
    %v182 = vld [vmem:[#allocation7 + $0x48] sm:$0xff]
    %v183 = vld [vmem:[#allocation7 + $0x50] sm:$0xff]
    %v184 = vld [vmem:[#allocation7 + $0x58] sm:$0xff]
    %v185 = vld [vmem:[#allocation7 + $0x60] sm:$0xff]
    %v186 = vld [vmem:[#allocation7 + $0x68] sm:$0xff]
    %v187 = vld [vmem:[#allocation7 + $0x70] sm:$0xff]
    %v188 = vld [vmem:[#allocation7 + $0x78] sm:$0xff]
    %v189 = vld [vmem:[%s6] sm:$0x1]
    %v190 = vld [vmem:[#allocation9] sm:$0xff]
    %v191 = vld [vmem:[#allocation9 + $0x8] sm:$0xff]
    %v192 = vld [vmem:[#allocation9 + $0x10] sm:$0xff]
    %v193 = vld [vmem:[#allocation9 + $0x18] sm:$0xff]
    %v194 = vld [vmem:[#allocation9 + $0x20] sm:$0xff]
    %v195 = vld [vmem:[#allocation9 + $0x28] sm:$0xff]
    %v196 = vld [vmem:[#allocation9 + $0x30] sm:$0xff]
    %v197 = vld [vmem:[#allocation9 + $0x38] sm:$0xff]
    %v198 = vld [vmem:[#allocation9 + $0x40] sm:$0xff]
    %v199 = vld [vmem:[#allocation9 + $0x48] sm:$0xff]
    %v200 = vld [vmem:[#allocation9 + $0x50] sm:$0xff]
    %v201 = vld [vmem:[#allocation9 + $0x58] sm:$0xff]
    %v202 = vld [vmem:[#allocation9 + $0x60] sm:$0xff]
    %v203 = vld [vmem:[#allocation9 + $0x68] sm:$0xff]
    %v204 = vld [vmem:[#allocation9 + $0x70] sm:$0xff]
    %v205 = vld [vmem:[#allocation9 + $0x78] sm:$0xff]
    %v206 = vld [vmem:[%s8] sm:$0x1]
    %v208 = vlaneseq
    %v209 = vshrl.u32 %v208, 7
    %v210 = vsub.s32 0, %v209
    %v211 = vrot.slane %v189, %v210
    %213 = vmatprep.subr.mxu0 0.0
    %214 = vmatpush1.msra.mxu0 %v188
    %215 = vmatprep.subr.mxu0 0.0
    %216 = vmatpush1.msra.mxu0 %v187
    %217 = vmatprep.subr.mxu0 0.0
    %218 = vmatpush1.msra.mxu0 %v186
    %219 = vmatprep.subr.mxu0 0.0
    %220 = vmatpush1.msra.mxu0 %v185
    %221 = vmatprep.subr.mxu0 0.0
    %222 = vmatpush1.msra.mxu0 %v184
    %223 = vmatprep.subr.mxu0 0.0
    %224 = vmatpush1.msra.mxu0 %v183
    %225 = vmatprep.subr.mxu0 0.0
    %226 = vmatpush1.msra.mxu0 %v182
    %227 = vmatprep.subr.mxu0 0.0
    %228 = vmatpush1.msra.mxu0 %v181
    %229 = vmatprep.subr.mxu0 0.0
    %230 = vmatpush1.msra.mxu0 %v180
    %231 = vmatprep.subr.mxu0 0.0
    %232 = vmatpush1.msra.mxu0 %v179
    %233 = vmatprep.subr.mxu0 0.0
    %234 = vmatpush1.msra.mxu0 %v178
    %235 = vmatprep.subr.mxu0 0.0
    %236 = vmatpush1.msra.mxu0 %v177
    %237 = vmatprep.subr.mxu0 0.0
    %238 = vmatpush1.msra.mxu0 %v176
    %239 = vmatprep.subr.mxu0 0.0
    %240 = vmatpush1.msra.mxu0 %v175
    %241 = vmatprep.subr.mxu0 0.0
    %242 = vmatpush1.msra.mxu0 %v174
    %243 = vmatprep.subr.mxu0 0.0
    %244 = vmatpush1.msra.mxu0 %v173
    %245 = vmatprep.subr.mxu0 0.0
    %246 = vmatpush2.msra.mxu0 0.0
    %247 = vmatprep.subr.mxu0 0.0
    %248 = vmatpush2.msra.mxu0 0.0
    %249 = vmatprep.subr.mxu0 0.0
    %250 = vmatpush2.msra.mxu0 0.0
    %251 = vmatprep.subr.mxu0 0.0
    %252 = vmatpush2.msra.mxu0 0.0
    %253 = vmatprep.subr.mxu0 0.0
    %254 = vmatpush2.msra.mxu0 0.0
    %255 = vmatprep.subr.mxu0 0.0
    %256 = vmatpush2.msra.mxu0 0.0
    %257 = vmatprep.subr.mxu0 0.0
    %258 = vmatpush2.msra.mxu0 0.0
    %259 = vmatprep.subr.mxu0 0.0
    %260 = vmatpush2.msra.mxu0 0.0
    %261 = vmatprep.subr.mxu0 0.0
    %262 = vmatpush2.msra.mxu0 0.0
    %263 = vmatprep.subr.mxu0 0.0
    %264 = vmatpush2.msra.mxu0 0.0
    %265 = vmatprep.subr.mxu0 0.0
    %266 = vmatpush2.msra.mxu0 0.0
    %267 = vmatprep.subr.mxu0 0.0
    %268 = vmatpush2.msra.mxu0 0.0
    %269 = vmatprep.subr.mxu0 0.0
    %270 = vmatpush2.msra.mxu0 0.0
    %271 = vmatprep.subr.mxu0 0.0
    %272 = vmatpush2.msra.mxu0 0.0
    %273 = vmatprep.subr.mxu0 0.0
    %274 = vmatpush2.msra.mxu0 0.0
    %275 = vmatprep.subr.mxu0 0.0
    %276 = vmatpush2.msra.mxu0 0.0
    %277 = vmatprep.mubr.f32.mxu0 0.0
    %278 = vmatmul.mubr.f32.gmra.mxu0 %v171
    %v279 = vpop.f32.mrf.mxu0
    %v280 = vadd.f32 %v211, %v279
    %v281 = vpop.f32.mrf.mxu0
    %282 = vmatprep.mubr.f32.mxu0 0.0
    %283 = vmatmul.mubr.f32.gmra.mxu0 %v172
    %v284 = vpop.f32.mrf.mxu0
    %v285 = vadd.f32 %v211, %v284
    %v286 = vpop.f32.mrf.mxu0
    %287 = vdwg.mxu0
    %v288 = vmax.f32 %v280, 0.0
    %v289 = vmax.f32 %v285, 0.0
    %v291 = vlaneseq
    %v292 = vshrl.u32 %v291, 7
    %v293 = vsub.s32 0, %v292
    %v294 = vrot.slane %v206, %v293
    %296 = vmatprep.subr.mxu0 0.0
    %297 = vmatpush1.msra.mxu0 %v205
    %298 = vmatprep.subr.mxu0 0.0
    %299 = vmatpush1.msra.mxu0 %v204
    %300 = vmatprep.subr.mxu0 0.0
    %301 = vmatpush1.msra.mxu0 %v203
    %302 = vmatprep.subr.mxu0 0.0
    %303 = vmatpush1.msra.mxu0 %v202
    %304 = vmatprep.subr.mxu0 0.0
    %305 = vmatpush1.msra.mxu0 %v201
    %306 = vmatprep.subr.mxu0 0.0
    %307 = vmatpush1.msra.mxu0 %v200
    %308 = vmatprep.subr.mxu0 0.0
    %309 = vmatpush1.msra.mxu0 %v199
    %310 = vmatprep.subr.mxu0 0.0
    %311 = vmatpush1.msra.mxu0 %v198
    %312 = vmatprep.subr.mxu0 0.0
    %313 = vmatpush1.msra.mxu0 %v197
    %314 = vmatprep.subr.mxu0 0.0
    %315 = vmatpush1.msra.mxu0 %v196
    %316 = vmatprep.subr.mxu0 0.0
    %317 = vmatpush1.msra.mxu0 %v195
    %318 = vmatprep.subr.mxu0 0.0
    %319 = vmatpush1.msra.mxu0 %v194
    %320 = vmatprep.subr.mxu0 0.0
    %321 = vmatpush1.msra.mxu0 %v193
    %322 = vmatprep.subr.mxu0 0.0
    %323 = vmatpush1.msra.mxu0 %v192
    %324 = vmatprep.subr.mxu0 0.0
    %325 = vmatpush1.msra.mxu0 %v191
    %326 = vmatprep.subr.mxu0 0.0
    %327 = vmatpush1.msra.mxu0 %v190
    %328 = vmatprep.subr.mxu0 0.0
    %329 = vmatpush2.msra.mxu0 0.0
    %330 = vmatprep.subr.mxu0 0.0
    %331 = vmatpush2.msra.mxu0 0.0
    %332 = vmatprep.subr.mxu0 0.0
    %333 = vmatpush2.msra.mxu0 0.0
    %334 = vmatprep.subr.mxu0 0.0
    %335 = vmatpush2.msra.mxu0 0.0
    %336 = vmatprep.subr.mxu0 0.0
    %337 = vmatpush2.msra.mxu0 0.0
    %338 = vmatprep.subr.mxu0 0.0
    %339 = vmatpush2.msra.mxu0 0.0
    %340 = vmatprep.subr.mxu0 0.0
    %341 = vmatpush2.msra.mxu0 0.0
    %342 = vmatprep.subr.mxu0 0.0
    %343 = vmatpush2.msra.mxu0 0.0
    %344 = vmatprep.subr.mxu0 0.0
    %345 = vmatpush2.msra.mxu0 0.0
    %346 = vmatprep.subr.mxu0 0.0
    %347 = vmatpush2.msra.mxu0 0.0
    %348 = vmatprep.subr.mxu0 0.0
    %349 = vmatpush2.msra.mxu0 0.0
    %350 = vmatprep.subr.mxu0 0.0
    %351 = vmatpush2.msra.mxu0 0.0
    %352 = vmatprep.subr.mxu0 0.0
    %353 = vmatpush2.msra.mxu0 0.0
    %354 = vmatprep.subr.mxu0 0.0
    %355 = vmatpush2.msra.mxu0 0.0
    %356 = vmatprep.subr.mxu0 0.0
    %357 = vmatpush2.msra.mxu0 0.0
    %358 = vmatprep.subr.mxu0 0.0
    %359 = vmatpush2.msra.mxu0 0.0
    %360 = vmatprep.mubr.f32.mxu0 0.0
    %361 = vmatmul.mubr.f32.gmra.mxu0 %v288
    %v362 = vpop.f32.mrf.mxu0
    %v363 = vadd.f32 %v294, %v362
    %v364 = vpop.f32.mrf.mxu0
    %365 = vmatprep.mubr.f32.mxu0 0.0
    %366 = vmatmul.mubr.f32.gmra.mxu0 %v289
    %v367 = vpop.f32.mrf.mxu0
    %v368 = vadd.f32 %v294, %v367
    %v369 = vpop.f32.mrf.mxu0
    %370 = vdwg.mxu0
    %v371 = vld [vmem:[#allocation6] sm:$0xff]
    %v372 = vld [vmem:[#allocation6 + $0x8] sm:$0xff]
    %v373 = vld [vmem:[#allocation6 + $0x10] sm:$0xff]
    %v374 = vld [vmem:[#allocation6 + $0x18] sm:$0xff]
    %v375 = vld [vmem:[#allocation10] sm:$0xff]
    %v376 = vld [vmem:[#allocation10 + $0x8] sm:$0xff]
    %v377 = vld [vmem:[#allocation10 + $0x10] sm:$0xff]
    %v378 = vld [vmem:[#allocation10 + $0x18] sm:$0xff]
    %v379 = vld [vmem:[#allocation10 + $0x20] sm:$0xff]
    %v380 = vld [vmem:[#allocation10 + $0x28] sm:$0xff]
    %v381 = vld [vmem:[#allocation10 + $0x30] sm:$0xff]
    %v382 = vld [vmem:[#allocation10 + $0x38] sm:$0xff]
    %v383 = vld [vmem:[#allocation10 + $0x40] sm:$0xff]
    %v384 = vld [vmem:[#allocation10 + $0x48] sm:$0xff]
    %v385 = vld [vmem:[#allocation10 + $0x50] sm:$0xff]
    %v386 = vld [vmem:[#allocation10 + $0x58] sm:$0xff]
    %v387 = vld [vmem:[#allocation10 + $0x60] sm:$0xff]
    %v388 = vld [vmem:[#allocation10 + $0x68] sm:$0xff]
    %v389 = vld [vmem:[#allocation10 + $0x70] sm:$0xff]
    %v390 = vld [vmem:[#allocation10 + $0x78] sm:$0xff]
    %v391 = vld [vmem:[%s10] sm:$0x1]
    %v392 = vld [vmem:[#allocation12] sm:$0xff]
    %v393 = vld [vmem:[#allocation12 + $0x8] sm:$0xff]
    %v394 = vld [vmem:[#allocation12 + $0x10] sm:$0xff]
    %v395 = vld [vmem:[#allocation12 + $0x18] sm:$0xff]
    %v396 = vld [vmem:[#allocation12 + $0x20] sm:$0xff]
    %v397 = vld [vmem:[#allocation12 + $0x28] sm:$0xff]
    %v398 = vld [vmem:[#allocation12 + $0x30] sm:$0xff]
    %v399 = vld [vmem:[#allocation12 + $0x38] sm:$0xff]
    %v400 = vld [vmem:[#allocation12 + $0x40] sm:$0xff]
    %v401 = vld [vmem:[#allocation12 + $0x48] sm:$0xff]
    %v402 = vld [vmem:[#allocation12 + $0x50] sm:$0xff]
    %v403 = vld [vmem:[#allocation12 + $0x58] sm:$0xff]
    %v404 = vld [vmem:[#allocation12 + $0x60] sm:$0xff]
    %v405 = vld [vmem:[#allocation12 + $0x68] sm:$0xff]
    %v406 = vld [vmem:[#allocation12 + $0x70] sm:$0xff]
    %v407 = vld [vmem:[#allocation12 + $0x78] sm:$0xff]
    %v408 = vld [vmem:[%s12] sm:$0x1]
    %v410 = vlaneseq
    %v411 = vshrl.u32 %v410, 7
    %v412 = vsub.s32 0, %v411
    %v413 = vrot.slane %v391, %v412
    %415 = vmatprep.subr.mxu0 0.0
    %416 = vmatpush1.msra.mxu0 %v390
    %417 = vmatprep.subr.mxu0 0.0
    %418 = vmatpush1.msra.mxu0 %v389
    %419 = vmatprep.subr.mxu0 0.0
    %420 = vmatpush1.msra.mxu0 %v388
    %421 = vmatprep.subr.mxu0 0.0
    %422 = vmatpush1.msra.mxu0 %v387
    %423 = vmatprep.subr.mxu0 0.0
    %424 = vmatpush1.msra.mxu0 %v386
    %425 = vmatprep.subr.mxu0 0.0
    %426 = vmatpush1.msra.mxu0 %v385
    %427 = vmatprep.subr.mxu0 0.0
    %428 = vmatpush1.msra.mxu0 %v384
    %429 = vmatprep.subr.mxu0 0.0
    %430 = vmatpush1.msra.mxu0 %v383
    %431 = vmatprep.subr.mxu0 0.0
    %432 = vmatpush1.msra.mxu0 %v382
    %433 = vmatprep.subr.mxu0 0.0
    %434 = vmatpush1.msra.mxu0 %v381
    %435 = vmatprep.subr.mxu0 0.0
    %436 = vmatpush1.msra.mxu0 %v380
    %437 = vmatprep.subr.mxu0 0.0
    %438 = vmatpush1.msra.mxu0 %v379
    %439 = vmatprep.subr.mxu0 0.0
    %440 = vmatpush1.msra.mxu0 %v378
    %441 = vmatprep.subr.mxu0 0.0
    %442 = vmatpush1.msra.mxu0 %v377
    %443 = vmatprep.subr.mxu0 0.0
    %444 = vmatpush1.msra.mxu0 %v376
    %445 = vmatprep.subr.mxu0 0.0
    %446 = vmatpush1.msra.mxu0 %v375
    %447 = vmatprep.subr.mxu0 0.0
    %448 = vmatpush2.msra.mxu0 0.0
    %449 = vmatprep.subr.mxu0 0.0
    %450 = vmatpush2.msra.mxu0 0.0
    %451 = vmatprep.subr.mxu0 0.0
    %452 = vmatpush2.msra.mxu0 0.0
    %453 = vmatprep.subr.mxu0 0.0
    %454 = vmatpush2.msra.mxu0 0.0
    %455 = vmatprep.subr.mxu0 0.0
    %456 = vmatpush2.msra.mxu0 0.0
    %457 = vmatprep.subr.mxu0 0.0
    %458 = vmatpush2.msra.mxu0 0.0
    %459 = vmatprep.subr.mxu0 0.0
    %460 = vmatpush2.msra.mxu0 0.0
    %461 = vmatprep.subr.mxu0 0.0
    %462 = vmatpush2.msra.mxu0 0.0
    %463 = vmatprep.subr.mxu0 0.0
    %464 = vmatpush2.msra.mxu0 0.0
    %465 = vmatprep.subr.mxu0 0.0
    %466 = vmatpush2.msra.mxu0 0.0
    %467 = vmatprep.subr.mxu0 0.0
    %468 = vmatpush2.msra.mxu0 0.0
    %469 = vmatprep.subr.mxu0 0.0
    %470 = vmatpush2.msra.mxu0 0.0
    %471 = vmatprep.subr.mxu0 0.0
    %472 = vmatpush2.msra.mxu0 0.0
    %473 = vmatprep.subr.mxu0 0.0
    %474 = vmatpush2.msra.mxu0 0.0
    %475 = vmatprep.subr.mxu0 0.0
    %476 = vmatpush2.msra.mxu0 0.0
    %477 = vmatprep.subr.mxu0 0.0
    %478 = vmatpush2.msra.mxu0 0.0
    %479 = vmatprep.mubr.f32.mxu0 0.0
    %480 = vmatmul.mubr.f32.gmra.mxu0 %v371
    %v481 = vpop.f32.mrf.mxu0
    %v482 = vadd.f32 %v413, %v481
    %v483 = vpop.f32.mrf.mxu0
    %484 = vmatprep.mubr.f32.mxu0 0.0
    %485 = vmatmul.mubr.f32.gmra.mxu0 %v372
    %v486 = vpop.f32.mrf.mxu0
    %v487 = vadd.f32 %v413, %v486
    %v488 = vpop.f32.mrf.mxu0
    %489 = vmatprep.mubr.f32.mxu0 0.0
    %490 = vmatmul.mubr.f32.gmra.mxu0 %v373
    %v491 = vpop.f32.mrf.mxu0
    %v492 = vadd.f32 %v413, %v491
    %v493 = vpop.f32.mrf.mxu0
    %494 = vmatprep.mubr.f32.mxu0 0.0
    %495 = vmatmul.mubr.f32.gmra.mxu0 %v374
    %v496 = vpop.f32.mrf.mxu0
    %v497 = vadd.f32 %v413, %v496
    %v498 = vpop.f32.mrf.mxu0
    %499 = vdwg.mxu0
    %v500 = vmax.f32 %v482, 0.0
    %v501 = vmax.f32 %v487, 0.0
    %v502 = vmax.f32 %v492, 0.0
    %v503 = vmax.f32 %v497, 0.0
    %v505 = vlaneseq
    %v506 = vshrl.u32 %v505, 7
    %v507 = vsub.s32 0, %v506
    %v508 = vrot.slane %v408, %v507
    %510 = vmatprep.subr.mxu0 0.0
    %511 = vmatpush1.msra.mxu0 %v407
    %512 = vmatprep.subr.mxu0 0.0
    %513 = vmatpush1.msra.mxu0 %v406
    %514 = vmatprep.subr.mxu0 0.0
    %515 = vmatpush1.msra.mxu0 %v405
    %516 = vmatprep.subr.mxu0 0.0
    %517 = vmatpush1.msra.mxu0 %v404
    %518 = vmatprep.subr.mxu0 0.0
    %519 = vmatpush1.msra.mxu0 %v403
    %520 = vmatprep.subr.mxu0 0.0
    %521 = vmatpush1.msra.mxu0 %v402
    %522 = vmatprep.subr.mxu0 0.0
    %523 = vmatpush1.msra.mxu0 %v401
    %524 = vmatprep.subr.mxu0 0.0
    %525 = vmatpush1.msra.mxu0 %v400
    %526 = vmatprep.subr.mxu0 0.0
    %527 = vmatpush1.msra.mxu0 %v399
    %528 = vmatprep.subr.mxu0 0.0
    %529 = vmatpush1.msra.mxu0 %v398
    %530 = vmatprep.subr.mxu0 0.0
    %531 = vmatpush1.msra.mxu0 %v397
    %532 = vmatprep.subr.mxu0 0.0
    %533 = vmatpush1.msra.mxu0 %v396
    %534 = vmatprep.subr.mxu0 0.0
    %535 = vmatpush1.msra.mxu0 %v395
    %536 = vmatprep.subr.mxu0 0.0
    %537 = vmatpush1.msra.mxu0 %v394
    %538 = vmatprep.subr.mxu0 0.0
    %539 = vmatpush1.msra.mxu0 %v393
    %540 = vmatprep.subr.mxu0 0.0
    %541 = vmatpush1.msra.mxu0 %v392
    %542 = vmatprep.subr.mxu0 0.0
    %543 = vmatpush2.msra.mxu0 0.0
    %544 = vmatprep.subr.mxu0 0.0
    %545 = vmatpush2.msra.mxu0 0.0
    %546 = vmatprep.subr.mxu0 0.0
    %547 = vmatpush2.msra.mxu0 0.0
    %548 = vmatprep.subr.mxu0 0.0
    %549 = vmatpush2.msra.mxu0 0.0
    %550 = vmatprep.subr.mxu0 0.0
    %551 = vmatpush2.msra.mxu0 0.0
    %552 = vmatprep.subr.mxu0 0.0
    %553 = vmatpush2.msra.mxu0 0.0
    %554 = vmatprep.subr.mxu0 0.0
    %555 = vmatpush2.msra.mxu0 0.0
    %556 = vmatprep.subr.mxu0 0.0
    %557 = vmatpush2.msra.mxu0 0.0
    %558 = vmatprep.subr.mxu0 0.0
    %559 = vmatpush2.msra.mxu0 0.0
    %560 = vmatprep.subr.mxu0 0.0
    %561 = vmatpush2.msra.mxu0 0.0
    %562 = vmatprep.subr.mxu0 0.0
    %563 = vmatpush2.msra.mxu0 0.0
    %564 = vmatprep.subr.mxu0 0.0
    %565 = vmatpush2.msra.mxu0 0.0
    %566 = vmatprep.subr.mxu0 0.0
    %567 = vmatpush2.msra.mxu0 0.0
    %568 = vmatprep.subr.mxu0 0.0
    %569 = vmatpush2.msra.mxu0 0.0
    %570 = vmatprep.subr.mxu0 0.0
    %571 = vmatpush2.msra.mxu0 0.0
    %572 = vmatprep.subr.mxu0 0.0
    %573 = vmatpush2.msra.mxu0 0.0
    %574 = vmatprep.mubr.f32.mxu0 0.0
    %575 = vmatmul.mubr.f32.gmra.mxu0 %v500
    %v576 = vpop.f32.mrf.mxu0
    %v577 = vadd.f32 %v508, %v576
    %v578 = vpop.f32.mrf.mxu0
    %579 = vmatprep.mubr.f32.mxu0 0.0
    %580 = vmatmul.mubr.f32.gmra.mxu0 %v501
    %v581 = vpop.f32.mrf.mxu0
    %v582 = vadd.f32 %v508, %v581
    %v583 = vpop.f32.mrf.mxu0
    %584 = vmatprep.mubr.f32.mxu0 0.0
    %585 = vmatmul.mubr.f32.gmra.mxu0 %v502
    %v586 = vpop.f32.mrf.mxu0
    %v587 = vadd.f32 %v508, %v586
    %v588 = vpop.f32.mrf.mxu0
    %589 = vmatprep.mubr.f32.mxu0 0.0
    %590 = vmatmul.mubr.f32.gmra.mxu0 %v503
    %v591 = vpop.f32.mrf.mxu0
    %v592 = vadd.f32 %v508, %v591
    %v593 = vpop.f32.mrf.mxu0
    %594 = vdwg.mxu0
    %v595 = vld [vmem:[%s3] sm:$0xf]
    %v596 = vld [vmem:[%s3 + $0x4] sm:$0xf]
    %v597 = vld [vmem:[%s3 + $0x8] sm:$0xf]
    %v598 = vld [vmem:[%s3 + $0xc] sm:$0xf]
    %v599 = vunpack.c.l.bf16 %v595
    %v600 = vunpack.c.l.bf16 %v596
    %v601 = vunpack.c.l.bf16 %v597
    %v602 = vunpack.c.l.bf16 %v598
    %v603 = vld [vmem:[%s4] sm:$0xf]
    %v604 = vld [vmem:[%s4 + $0x4] sm:$0xf]
    %v605 = vunpack.c.l.bf16 %v603
    %v606 = vunpack.c.l.bf16 %v604
    %vm607 = vcmask 130048
    %v609 = vsel %vm607, %v599, 0
    %v612 = vsel %vm607, %v600, 0
    %v615 = vsel %vm607, %v601, 0
    %v618 = vsel %vm607, %v602, 0
    %620 = vmatprep.subr.mxu0 0.0
    %621 = vmatpush1.msra.mxu0 0.0
    %622 = vmatprep.subr.mxu0 0.0
    %623 = vmatpush1.msra.mxu0 0.0
    %624 = vmatprep.subr.mxu0 0.0
    %625 = vmatpush1.msra.mxu0 0.0
    %626 = vmatprep.subr.mxu0 0.0
    %627 = vmatpush1.msra.mxu0 0.0
    %628 = vmatprep.subr.mxu0 0.0
    %629 = vmatpush1.msra.mxu0 0.0
    %630 = vmatprep.subr.mxu0 0.0
    %631 = vmatpush1.msra.mxu0 0.0
    %632 = vmatprep.subr.mxu0 0.0
    %633 = vmatpush1.msra.mxu0 0.0
    %634 = vmatprep.subr.mxu0 0.0
    %635 = vmatpush1.msra.mxu0 0.0
    %636 = vmatprep.subr.mxu0 0.0
    %637 = vmatpush1.msra.mxu0 0.0
    %638 = vmatprep.subr.mxu0 0.0
    %639 = vmatpush1.msra.mxu0 0.0
    %640 = vmatprep.subr.mxu0 0.0
    %641 = vmatpush1.msra.mxu0 0.0
    %642 = vmatprep.subr.mxu0 0.0
    %643 = vmatpush1.msra.mxu0 0.0
    %644 = vmatprep.subr.mxu0 0.0
    %645 = vmatpush1.msra.mxu0 0.0
    %646 = vmatprep.subr.mxu0 0.0
    %647 = vmatpush1.msra.mxu0 0.0
    %648 = vmatprep.subr.mxu0 0.0
    %649 = vmatpush1.msra.mxu0 %v368
    %650 = vmatprep.subr.mxu0 0.0
    %651 = vmatpush1.msra.mxu0 %v363
    %652 = vmatprep.subr.mxu0 0.0
    %653 = vmatpush2.msra.mxu0 0.0
    %654 = vmatprep.subr.mxu0 0.0
    %655 = vmatpush2.msra.mxu0 0.0
    %656 = vmatprep.subr.mxu0 0.0
    %657 = vmatpush2.msra.mxu0 0.0
    %658 = vmatprep.subr.mxu0 0.0
    %659 = vmatpush2.msra.mxu0 0.0
    %660 = vmatprep.subr.mxu0 0.0
    %661 = vmatpush2.msra.mxu0 0.0
    %662 = vmatprep.subr.mxu0 0.0
    %663 = vmatpush2.msra.mxu0 0.0
    %664 = vmatprep.subr.mxu0 0.0
    %665 = vmatpush2.msra.mxu0 0.0
    %666 = vmatprep.subr.mxu0 0.0
    %667 = vmatpush2.msra.mxu0 0.0
    %668 = vmatprep.subr.mxu0 0.0
    %669 = vmatpush2.msra.mxu0 0.0
    %670 = vmatprep.subr.mxu0 0.0
    %671 = vmatpush2.msra.mxu0 0.0
    %672 = vmatprep.subr.mxu0 0.0
    %673 = vmatpush2.msra.mxu0 0.0
    %674 = vmatprep.subr.mxu0 0.0
    %675 = vmatpush2.msra.mxu0 0.0
    %676 = vmatprep.subr.mxu0 0.0
    %677 = vmatpush2.msra.mxu0 0.0
    %678 = vmatprep.subr.mxu0 0.0
    %679 = vmatpush2.msra.mxu0 0.0
    %680 = vmatprep.subr.mxu0 0.0
    %681 = vmatpush2.msra.mxu0 0.0
    %682 = vmatprep.subr.mxu0 0.0
    %683 = vmatpush2.msra.mxu0 0.0
    %684 = vmatprep.mubr.f32.mxu0 0.0
    %685 = vmatmul.mubr.f32.gmra.mxu0 %v609
    %v686 = vpop.f32.mrf.mxu0
    %v687 = vadd.f32 %v577, %v686
    %v688 = vpop.f32.mrf.mxu0
    %689 = vmatprep.mubr.f32.mxu0 0.0
    %690 = vmatmul.mubr.f32.gmra.mxu0 %v612
    %v691 = vpop.f32.mrf.mxu0
    %v692 = vadd.f32 %v582, %v691
    %v693 = vpop.f32.mrf.mxu0
    %694 = vmatprep.mubr.f32.mxu0 0.0
    %695 = vmatmul.mubr.f32.gmra.mxu0 %v615
    %v696 = vpop.f32.mrf.mxu0
    %v697 = vadd.f32 %v587, %v696
    %v698 = vpop.f32.mrf.mxu0
    %699 = vmatprep.mubr.f32.mxu0 0.0
    %700 = vmatmul.mubr.f32.gmra.mxu0 %v618
    %v701 = vpop.f32.mrf.mxu0
    %v702 = vadd.f32 %v592, %v701
    %v703 = vpop.f32.mrf.mxu0
    %704 = vdwg.mxu0
    %v705 = vmax.f32 %v687, 0.0
    %v706 = vmax.f32 %v692, 0.0
    %v707 = vmax.f32 %v697, 0.0
    %v708 = vmax.f32 %v702, 0.0
    %vm709 = vcmask 261120
    %v711 = vsel %vm709, %v605, 0
    %v714 = vsel %vm709, %v606, 0
    %716 = vmatprep.subr.mxu0 0.0
    %717 = vmatpush1.msra.mxu0 0.0
    %718 = vmatprep.subr.mxu0 0.0
    %719 = vmatpush1.msra.mxu0 0.0
    %720 = vmatprep.subr.mxu0 0.0
    %721 = vmatpush1.msra.mxu0 0.0
    %722 = vmatprep.subr.mxu0 0.0
    %723 = vmatpush1.msra.mxu0 0.0
    %724 = vmatprep.subr.mxu0 0.0
    %725 = vmatpush1.msra.mxu0 0.0
    %726 = vmatprep.subr.mxu0 0.0
    %727 = vmatpush1.msra.mxu0 0.0
    %728 = vmatprep.subr.mxu0 0.0
    %729 = vmatpush1.msra.mxu0 0.0
    %730 = vmatprep.subr.mxu0 0.0
    %731 = vmatpush1.msra.mxu0 0.0
    %732 = vmatprep.subr.mxu0 0.0
    %733 = vmatpush1.msra.mxu0 0.0
    %734 = vmatprep.subr.mxu0 0.0
    %735 = vmatpush1.msra.mxu0 0.0
    %736 = vmatprep.subr.mxu0 0.0
    %737 = vmatpush1.msra.mxu0 0.0
    %738 = vmatprep.subr.mxu0 0.0
    %739 = vmatpush1.msra.mxu0 0.0
    %740 = vmatprep.subr.mxu0 0.0
    %741 = vmatpush1.msra.mxu0 %v708
    %742 = vmatprep.subr.mxu0 0.0
    %743 = vmatpush1.msra.mxu0 %v707
    %744 = vmatprep.subr.mxu0 0.0
    %745 = vmatpush1.msra.mxu0 %v706
    %746 = vmatprep.subr.mxu0 0.0
    %747 = vmatpush1.msra.mxu0 %v705
    %748 = vmatprep.subr.mxu0 0.0
    %749 = vmatpush2.msra.mxu0 0.0
    %750 = vmatprep.subr.mxu0 0.0
    %751 = vmatpush2.msra.mxu0 0.0
    %752 = vmatprep.subr.mxu0 0.0
    %753 = vmatpush2.msra.mxu0 0.0
    %754 = vmatprep.subr.mxu0 0.0
    %755 = vmatpush2.msra.mxu0 0.0
    %756 = vmatprep.subr.mxu0 0.0
    %757 = vmatpush2.msra.mxu0 0.0
    %758 = vmatprep.subr.mxu0 0.0
    %759 = vmatpush2.msra.mxu0 0.0
    %760 = vmatprep.subr.mxu0 0.0
    %761 = vmatpush2.msra.mxu0 0.0
    %762 = vmatprep.subr.mxu0 0.0
    %763 = vmatpush2.msra.mxu0 0.0
    %764 = vmatprep.subr.mxu0 0.0
    %765 = vmatpush2.msra.mxu0 0.0
    %766 = vmatprep.subr.mxu0 0.0
    %767 = vmatpush2.msra.mxu0 0.0
    %768 = vmatprep.subr.mxu0 0.0
    %769 = vmatpush2.msra.mxu0 0.0
    %770 = vmatprep.subr.mxu0 0.0
    %771 = vmatpush2.msra.mxu0 0.0
    %772 = vmatprep.subr.mxu0 0.0
    %773 = vmatpush2.msra.mxu0 0.0
    %774 = vmatprep.subr.mxu0 0.0
    %775 = vmatpush2.msra.mxu0 0.0
    %776 = vmatprep.subr.mxu0 0.0
    %777 = vmatpush2.msra.mxu0 0.0
    %778 = vmatprep.subr.mxu0 0.0
    %779 = vmatpush2.msra.mxu0 0.0
    %780 = vmatprep.mubr.f32.mxu0 0.0
    %781 = vmatmul.mubr.f32.gmra.mxu0 %v711
    %v782 = vpop.f32.mrf.mxu0
    %v783 = vadd.f32 0.0, %v782
    %v784 = vpop.f32.mrf.mxu0
    %785 = vmatprep.mubr.f32.mxu0 0.0
    %786 = vmatmul.mubr.f32.gmra.mxu0 %v714
    %v787 = vpop.f32.mrf.mxu0
    %v788 = vadd.f32 0.0, %v787
    %v789 = vpop.f32.mrf.mxu0
    %790 = vdwg.mxu0
    %s791 = sld [smem:[#allocation2]]
    %v792 = vstv %s791
    %v793 = vmul.f32 %v792, %v363
    %v794 = vmul.f32 %v792, %v368
    %v795 = vadd.f32 %v793, %v783
    %v796 = vadd.f32 %v794, %v788
    %v797 = vld [vmem:[#allocation13] sm:$0xff]
    %v798 = vld [vmem:[#allocation13 + $0x8] sm:$0xff]
    %v799 = vld [vmem:[#allocation13 + $0x10] sm:$0xff]
    %v800 = vld [vmem:[#allocation13 + $0x18] sm:$0xff]
    %v801 = vld [vmem:[#allocation13 + $0x20] sm:$0xff]
    %v802 = vld [vmem:[#allocation13 + $0x28] sm:$0xff]
    %v803 = vld [vmem:[#allocation13 + $0x30] sm:$0xff]
    %v804 = vld [vmem:[#allocation13 + $0x38] sm:$0xff]
    %v805 = vld [vmem:[#allocation13 + $0x40] sm:$0xff]
    %v806 = vld [vmem:[#allocation13 + $0x48] sm:$0xff]
    %v807 = vld [vmem:[#allocation13 + $0x50] sm:$0xff]
    %v808 = vld [vmem:[#allocation13 + $0x58] sm:$0xff]
    %v809 = vld [vmem:[#allocation13 + $0x60] sm:$0xff]
    %v810 = vld [vmem:[#allocation13 + $0x68] sm:$0xff]
    %v811 = vld [vmem:[#allocation13 + $0x70] sm:$0xff]
    %v812 = vld [vmem:[#allocation13 + $0x78] sm:$0xff]
    %v813 = vld [vmem:[%s14] sm:$0x1]
    %v814 = vld [vmem:[#allocation15] sm:$0xff]
    %v815 = vld [vmem:[#allocation15 + $0x8] sm:$0xff]
    %v816 = vld [vmem:[#allocation15 + $0x10] sm:$0xff]
    %v817 = vld [vmem:[#allocation15 + $0x18] sm:$0xff]
    %v818 = vld [vmem:[#allocation15 + $0x20] sm:$0xff]
    %v819 = vld [vmem:[#allocation15 + $0x28] sm:$0xff]
    %v820 = vld [vmem:[#allocation15 + $0x30] sm:$0xff]
    %v821 = vld [vmem:[#allocation15 + $0x38] sm:$0xff]
    %v822 = vld [vmem:[#allocation15 + $0x40] sm:$0xff]
    %v823 = vld [vmem:[#allocation15 + $0x48] sm:$0xff]
    %v824 = vld [vmem:[#allocation15 + $0x50] sm:$0xff]
    %v825 = vld [vmem:[#allocation15 + $0x58] sm:$0xff]
    %v826 = vld [vmem:[#allocation15 + $0x60] sm:$0xff]
    %v827 = vld [vmem:[#allocation15 + $0x68] sm:$0xff]
    %v828 = vld [vmem:[#allocation15 + $0x70] sm:$0xff]
    %v829 = vld [vmem:[#allocation15 + $0x78] sm:$0xff]
    %v830 = vld [vmem:[%s16] sm:$0x1]
    %v832 = vlaneseq
    %v833 = vshrl.u32 %v832, 7
    %v834 = vsub.s32 0, %v833
    %v835 = vrot.slane %v813, %v834
    %837 = vmatprep.subr.mxu0 0.0
    %838 = vmatpush1.msra.mxu0 %v812
    %839 = vmatprep.subr.mxu0 0.0
    %840 = vmatpush1.msra.mxu0 %v811
    %841 = vmatprep.subr.mxu0 0.0
    %842 = vmatpush1.msra.mxu0 %v810
    %843 = vmatprep.subr.mxu0 0.0
    %844 = vmatpush1.msra.mxu0 %v809
    %845 = vmatprep.subr.mxu0 0.0
    %846 = vmatpush1.msra.mxu0 %v808
    %847 = vmatprep.subr.mxu0 0.0
    %848 = vmatpush1.msra.mxu0 %v807
    %849 = vmatprep.subr.mxu0 0.0
    %850 = vmatpush1.msra.mxu0 %v806
    %851 = vmatprep.subr.mxu0 0.0
    %852 = vmatpush1.msra.mxu0 %v805
    %853 = vmatprep.subr.mxu0 0.0
    %854 = vmatpush1.msra.mxu0 %v804
    %855 = vmatprep.subr.mxu0 0.0
    %856 = vmatpush1.msra.mxu0 %v803
    %857 = vmatprep.subr.mxu0 0.0
    %858 = vmatpush1.msra.mxu0 %v802
    %859 = vmatprep.subr.mxu0 0.0
    %860 = vmatpush1.msra.mxu0 %v801
    %861 = vmatprep.subr.mxu0 0.0
    %862 = vmatpush1.msra.mxu0 %v800
    %863 = vmatprep.subr.mxu0 0.0
    %864 = vmatpush1.msra.mxu0 %v799
    %865 = vmatprep.subr.mxu0 0.0
    %866 = vmatpush1.msra.mxu0 %v798
    %867 = vmatprep.subr.mxu0 0.0
    %868 = vmatpush1.msra.mxu0 %v797
    %869 = vmatprep.subr.mxu0 0.0
    %870 = vmatpush2.msra.mxu0 0.0
    %871 = vmatprep.subr.mxu0 0.0
    %872 = vmatpush2.msra.mxu0 0.0
    %873 = vmatprep.subr.mxu0 0.0
    %874 = vmatpush2.msra.mxu0 0.0
    %875 = vmatprep.subr.mxu0 0.0
    %876 = vmatpush2.msra.mxu0 0.0
    %877 = vmatprep.subr.mxu0 0.0
    %878 = vmatpush2.msra.mxu0 0.0
    %879 = vmatprep.subr.mxu0 0.0
    %880 = vmatpush2.msra.mxu0 0.0
    %881 = vmatprep.subr.mxu0 0.0
    %882 = vmatpush2.msra.mxu0 0.0
    %883 = vmatprep.subr.mxu0 0.0
    %884 = vmatpush2.msra.mxu0 0.0
    %885 = vmatprep.subr.mxu0 0.0
    %886 = vmatpush2.msra.mxu0 0.0
    %887 = vmatprep.subr.mxu0 0.0
    %888 = vmatpush2.msra.mxu0 0.0
    %889 = vmatprep.subr.mxu0 0.0
    %890 = vmatpush2.msra.mxu0 0.0
    %891 = vmatprep.subr.mxu0 0.0
    %892 = vmatpush2.msra.mxu0 0.0
    %893 = vmatprep.subr.mxu0 0.0
    %894 = vmatpush2.msra.mxu0 0.0
    %895 = vmatprep.subr.mxu0 0.0
    %896 = vmatpush2.msra.mxu0 0.0
    %897 = vmatprep.subr.mxu0 0.0
    %898 = vmatpush2.msra.mxu0 0.0
    %899 = vmatprep.subr.mxu0 0.0
    %900 = vmatpush2.msra.mxu0 0.0
    %901 = vmatprep.mubr.f32.mxu0 0.0
    %902 = vmatmul.mubr.f32.gmra.mxu0 %v795
    %v903 = vpop.f32.mrf.mxu0
    %v904 = vadd.f32 %v835, %v903
    %v905 = vpop.f32.mrf.mxu0
    %906 = vmatprep.mubr.f32.mxu0 0.0
    %907 = vmatmul.mubr.f32.gmra.mxu0 %v796
    %v908 = vpop.f32.mrf.mxu0
    %v909 = vadd.f32 %v835, %v908
    %v910 = vpop.f32.mrf.mxu0
    %911 = vdwg.mxu0
    %v912 = vmax.f32 %v904, 0.0
    %v913 = vmax.f32 %v909, 0.0
    %v915 = vlaneseq
    %v916 = vshrl.u32 %v915, 7
    %v917 = vsub.s32 0, %v916
    %v918 = vrot.slane %v830, %v917
    %920 = vmatprep.subr.mxu0 0.0
    %921 = vmatpush1.msra.mxu0 %v829
    %922 = vmatprep.subr.mxu0 0.0
    %923 = vmatpush1.msra.mxu0 %v828
    %924 = vmatprep.subr.mxu0 0.0
    %925 = vmatpush1.msra.mxu0 %v827
    %926 = vmatprep.subr.mxu0 0.0
    %927 = vmatpush1.msra.mxu0 %v826
    %928 = vmatprep.subr.mxu0 0.0
    %929 = vmatpush1.msra.mxu0 %v825
    %930 = vmatprep.subr.mxu0 0.0
    %931 = vmatpush1.msra.mxu0 %v824
    %932 = vmatprep.subr.mxu0 0.0
    %933 = vmatpush1.msra.mxu0 %v823
    %934 = vmatprep.subr.mxu0 0.0
    %935 = vmatpush1.msra.mxu0 %v822
    %936 = vmatprep.subr.mxu0 0.0
    %937 = vmatpush1.msra.mxu0 %v821
    %938 = vmatprep.subr.mxu0 0.0
    %939 = vmatpush1.msra.mxu0 %v820
    %940 = vmatprep.subr.mxu0 0.0
    %941 = vmatpush1.msra.mxu0 %v819
    %942 = vmatprep.subr.mxu0 0.0
    %943 = vmatpush1.msra.mxu0 %v818
    %944 = vmatprep.subr.mxu0 0.0
    %945 = vmatpush1.msra.mxu0 %v817
    %946 = vmatprep.subr.mxu0 0.0
    %947 = vmatpush1.msra.mxu0 %v816
    %948 = vmatprep.subr.mxu0 0.0
    %949 = vmatpush1.msra.mxu0 %v815
    %950 = vmatprep.subr.mxu0 0.0
    %951 = vmatpush1.msra.mxu0 %v814
    %952 = vmatprep.subr.mxu0 0.0
    %953 = vmatpush2.msra.mxu0 0.0
    %954 = vmatprep.subr.mxu0 0.0
    %955 = vmatpush2.msra.mxu0 0.0
    %956 = vmatprep.subr.mxu0 0.0
    %957 = vmatpush2.msra.mxu0 0.0
    %958 = vmatprep.subr.mxu0 0.0
    %959 = vmatpush2.msra.mxu0 0.0
    %960 = vmatprep.subr.mxu0 0.0
    %961 = vmatpush2.msra.mxu0 0.0
    %962 = vmatprep.subr.mxu0 0.0
    %963 = vmatpush2.msra.mxu0 0.0
    %964 = vmatprep.subr.mxu0 0.0
    %965 = vmatpush2.msra.mxu0 0.0
    %966 = vmatprep.subr.mxu0 0.0
    %967 = vmatpush2.msra.mxu0 0.0
    %968 = vmatprep.subr.mxu0 0.0
    %969 = vmatpush2.msra.mxu0 0.0
    %970 = vmatprep.subr.mxu0 0.0
    %971 = vmatpush2.msra.mxu0 0.0
    %972 = vmatprep.subr.mxu0 0.0
    %973 = vmatpush2.msra.mxu0 0.0
    %974 = vmatprep.subr.mxu0 0.0
    %975 = vmatpush2.msra.mxu0 0.0
    %976 = vmatprep.subr.mxu0 0.0
    %977 = vmatpush2.msra.mxu0 0.0
    %978 = vmatprep.subr.mxu0 0.0
    %979 = vmatpush2.msra.mxu0 0.0
    %980 = vmatprep.subr.mxu0 0.0
    %981 = vmatpush2.msra.mxu0 0.0
    %982 = vmatprep.subr.mxu0 0.0
    %983 = vmatpush2.msra.mxu0 0.0
    %984 = vmatprep.mubr.f32.mxu0 0.0
    %985 = vmatmul.mubr.f32.gmra.mxu0 %v912
    %v986 = vpop.f32.mrf.mxu0
    %v987 = vadd.f32 %v918, %v986
    %v988 = vpop.f32.mrf.mxu0
    %989 = vmatprep.mubr.f32.mxu0 0.0
    %990 = vmatmul.mubr.f32.gmra.mxu0 %v913
    %v991 = vpop.f32.mrf.mxu0
    %v992 = vadd.f32 %v918, %v991
    %v993 = vpop.f32.mrf.mxu0
    %994 = vdwg.mxu0
    %v995 = vld [vmem:[%s17] sm:$0x1]
    %v996 = vld [vmem:[%s18] sm:$0x1]
    %v997 = vadd.f32 %v987, %v992
    %v998 = vrot.slane %v997, 4
    %v999 = vadd.f32 %v997, %v998
    %v1000 = vrot.slane %v999, 2
    %v1001 = vadd.f32 %v999, %v1000
    %v1002 = vrot.slane %v1001, 1
    %v1003 = vadd.f32 %v1001, %v1002
    %v1004 = vrcp.pop 16.0
    %v1005 = vmul.f32 %v1003, %v1004
    %v1006 = vsub.f32 %v987, %v1005
    %v1007 = vsub.f32 %v992, %v1005
    %v1008 = vmul.f32 %v1006, %v1006
    %v1009 = vmul.f32 %v1007, %v1007
    %v1010 = vadd.f32 %v1008, %v1009
    %v1011 = vrot.slane %v1010, 4
    %v1012 = vadd.f32 %v1010, %v1011
    %v1013 = vrot.slane %v1012, 2
    %v1014 = vadd.f32 %v1012, %v1013
    %v1015 = vrot.slane %v1014, 1
    %v1016 = vadd.f32 %v1014, %v1015
    %v1017 = vmul.f32 %v1016, %v1004
    %v1018 = vadd.f32 %v1017, 1e-05
    %v1019 = vrsqrt.pop %v1018
    %v1020 = vmul.f32 %v1006, %v1019
    %v1021 = vmul.f32 %v1007, %v1019
    %v1023 = vlaneseq
    %v1024 = vshrl.u32 %v1023, 7
    %v1025 = vsub.s32 0, %v1024
    %v1026 = vrot.slane %v995, %v1025
    %v1028 = vmul.f32 %v1020, %v1026
    %v1029 = vmul.f32 %v1021, %v1026
    %v1031 = vlaneseq
    %v1032 = vshrl.u32 %v1031, 7
    %v1033 = vsub.s32 0, %v1032
    %v1034 = vrot.slane %v996, %v1033
    %v1036 = vadd.f32 %v1028, %v1034
    %v1037 = vadd.f32 %v1029, %v1034
    %v1038 = vmax.f32 %v1036, 0.0
    %v1039 = vmax.f32 %v1037, 0.0
    %1040 = vmatprep.subr.mxu0 0.0
    %1041 = vmatpush1.msra.mxu0 0.0
    %1042 = vmatprep.subr.mxu0 0.0
    %1043 = vmatpush1.msra.mxu0 0.0
    %1044 = vmatprep.subr.mxu0 0.0
    %1045 = vmatpush1.msra.mxu0 0.0
    %1046 = vmatprep.subr.mxu0 0.0
    %1047 = vmatpush1.msra.mxu0 0.0
    %1048 = vmatprep.subr.mxu0 0.0
    %1049 = vmatpush1.msra.mxu0 0.0
    %1050 = vmatprep.subr.mxu0 0.0
    %1051 = vmatpush1.msra.mxu0 0.0
    %1052 = vmatprep.subr.mxu0 0.0
    %1053 = vmatpush1.msra.mxu0 0.0
    %1054 = vmatprep.subr.mxu0 0.0
    %1055 = vmatpush1.msra.mxu0 0.0
    %1056 = vmatprep.subr.mxu0 0.0
    %1057 = vmatpush1.msra.mxu0 0.0
    %1058 = vmatprep.subr.mxu0 0.0
    %1059 = vmatpush1.msra.mxu0 0.0
    %1060 = vmatprep.subr.mxu0 0.0
    %1061 = vmatpush1.msra.mxu0 0.0
    %1062 = vmatprep.subr.mxu0 0.0
    %1063 = vmatpush1.msra.mxu0 0.0
    %1064 = vmatprep.subr.mxu0 0.0
    %1065 = vmatpush1.msra.mxu0 0.0
    %1066 = vmatprep.subr.mxu0 0.0
    %1067 = vmatpush1.msra.mxu0 0.0
    %1068 = vmatprep.subr.mxu0 0.0
    %1069 = vmatpush1.msra.mxu0 %v1039
    %1070 = vmatprep.subr.mxu0 0.0
    %1071 = vmatpush1.msra.mxu0 %v1038
    %1072 = vmatprep.subr.mxu0 0.0
    %1073 = vmatpush2.msra.mxu0 0.0
    %1074 = vmatprep.subr.mxu0 0.0
    %1075 = vmatpush2.msra.mxu0 0.0
    %1076 = vmatprep.subr.mxu0 0.0
    %1077 = vmatpush2.msra.mxu0 0.0
    %1078 = vmatprep.subr.mxu0 0.0
    %1079 = vmatpush2.msra.mxu0 0.0
    %1080 = vmatprep.subr.mxu0 0.0
    %1081 = vmatpush2.msra.mxu0 0.0
    %1082 = vmatprep.subr.mxu0 0.0
    %1083 = vmatpush2.msra.mxu0 0.0
    %1084 = vmatprep.subr.mxu0 0.0
    %1085 = vmatpush2.msra.mxu0 0.0
    %1086 = vmatprep.subr.mxu0 0.0
    %1087 = vmatpush2.msra.mxu0 0.0
    %1088 = vmatprep.subr.mxu0 0.0
    %1089 = vmatpush2.msra.mxu0 0.0
    %1090 = vmatprep.subr.mxu0 0.0
    %1091 = vmatpush2.msra.mxu0 0.0
    %1092 = vmatprep.subr.mxu0 0.0
    %1093 = vmatpush2.msra.mxu0 0.0
    %1094 = vmatprep.subr.mxu0 0.0
    %1095 = vmatpush2.msra.mxu0 0.0
    %1096 = vmatprep.subr.mxu0 0.0
    %1097 = vmatpush2.msra.mxu0 0.0
    %1098 = vmatprep.subr.mxu0 0.0
    %1099 = vmatpush2.msra.mxu0 0.0
    %1100 = vmatprep.subr.mxu0 0.0
    %1101 = vmatpush2.msra.mxu0 0.0
    %1102 = vmatprep.subr.mxu0 0.0
    %1103 = vmatpush2.msra.mxu0 0.0
    %1104 = vmatprep.mubr.f32.mxu0 0.0
    %1105 = vmatmul.mubr.f32.gmra.mxu0 %v609
    %v1106 = vpop.f32.mrf.mxu0
    %v1107 = vadd.f32 %v577, %v1106
    %v1108 = vpop.f32.mrf.mxu0
    %1109 = vmatprep.mubr.f32.mxu0 0.0
    %1110 = vmatmul.mubr.f32.gmra.mxu0 %v612
    %v1111 = vpop.f32.mrf.mxu0
    %v1112 = vadd.f32 %v582, %v1111
    %v1113 = vpop.f32.mrf.mxu0
    %1114 = vmatprep.mubr.f32.mxu0 0.0
    %1115 = vmatmul.mubr.f32.gmra.mxu0 %v615
    %v1116 = vpop.f32.mrf.mxu0
    %v1117 = vadd.f32 %v587, %v1116
    %v1118 = vpop.f32.mrf.mxu0
    %1119 = vmatprep.mubr.f32.mxu0 0.0
    %1120 = vmatmul.mubr.f32.gmra.mxu0 %v618
    %v1121 = vpop.f32.mrf.mxu0
    %v1122 = vadd.f32 %v592, %v1121
    %v1123 = vpop.f32.mrf.mxu0
    %1124 = vdwg.mxu0
    %v1125 = vmax.f32 %v1107, 0.0
    %v1126 = vmax.f32 %v1112, 0.0
    %v1127 = vmax.f32 %v1117, 0.0
    %v1128 = vmax.f32 %v1122, 0.0
    %1129 = vmatprep.subr.mxu0 0.0
    %1130 = vmatpush1.msra.mxu0 0.0
    %1131 = vmatprep.subr.mxu0 0.0
    %1132 = vmatpush1.msra.mxu0 0.0
    %1133 = vmatprep.subr.mxu0 0.0
    %1134 = vmatpush1.msra.mxu0 0.0
    %1135 = vmatprep.subr.mxu0 0.0
    %1136 = vmatpush1.msra.mxu0 0.0
    %1137 = vmatprep.subr.mxu0 0.0
    %1138 = vmatpush1.msra.mxu0 0.0
    %1139 = vmatprep.subr.mxu0 0.0
    %1140 = vmatpush1.msra.mxu0 0.0
    %1141 = vmatprep.subr.mxu0 0.0
    %1142 = vmatpush1.msra.mxu0 0.0
    %1143 = vmatprep.subr.mxu0 0.0
    %1144 = vmatpush1.msra.mxu0 0.0
    %1145 = vmatprep.subr.mxu0 0.0
    %1146 = vmatpush1.msra.mxu0 0.0
    %1147 = vmatprep.subr.mxu0 0.0
    %1148 = vmatpush1.msra.mxu0 0.0
    %1149 = vmatprep.subr.mxu0 0.0
    %1150 = vmatpush1.msra.mxu0 0.0
    %1151 = vmatprep.subr.mxu0 0.0
    %1152 = vmatpush1.msra.mxu0 0.0
    %1153 = vmatprep.subr.mxu0 0.0
    %1154 = vmatpush1.msra.mxu0 %v1128
    %1155 = vmatprep.subr.mxu0 0.0
    %1156 = vmatpush1.msra.mxu0 %v1127
    %1157 = vmatprep.subr.mxu0 0.0
    %1158 = vmatpush1.msra.mxu0 %v1126
    %1159 = vmatprep.subr.mxu0 0.0
    %1160 = vmatpush1.msra.mxu0 %v1125
    %1161 = vmatprep.subr.mxu0 0.0
    %1162 = vmatpush2.msra.mxu0 0.0
    %1163 = vmatprep.subr.mxu0 0.0
    %1164 = vmatpush2.msra.mxu0 0.0
    %1165 = vmatprep.subr.mxu0 0.0
    %1166 = vmatpush2.msra.mxu0 0.0
    %1167 = vmatprep.subr.mxu0 0.0
    %1168 = vmatpush2.msra.mxu0 0.0
    %1169 = vmatprep.subr.mxu0 0.0
    %1170 = vmatpush2.msra.mxu0 0.0
    %1171 = vmatprep.subr.mxu0 0.0
    %1172 = vmatpush2.msra.mxu0 0.0
    %1173 = vmatprep.subr.mxu0 0.0
    %1174 = vmatpush2.msra.mxu0 0.0
    %1175 = vmatprep.subr.mxu0 0.0
    %1176 = vmatpush2.msra.mxu0 0.0
    %1177 = vmatprep.subr.mxu0 0.0
    %1178 = vmatpush2.msra.mxu0 0.0
    %1179 = vmatprep.subr.mxu0 0.0
    %1180 = vmatpush2.msra.mxu0 0.0
    %1181 = vmatprep.subr.mxu0 0.0
    %1182 = vmatpush2.msra.mxu0 0.0
    %1183 = vmatprep.subr.mxu0 0.0
    %1184 = vmatpush2.msra.mxu0 0.0
    %1185 = vmatprep.subr.mxu0 0.0
    %1186 = vmatpush2.msra.mxu0 0.0
    %1187 = vmatprep.subr.mxu0 0.0
    %1188 = vmatpush2.msra.mxu0 0.0
    %1189 = vmatprep.subr.mxu0 0.0
    %1190 = vmatpush2.msra.mxu0 0.0
    %1191 = vmatprep.subr.mxu0 0.0
    %1192 = vmatpush2.msra.mxu0 0.0
    %1193 = vmatprep.mubr.f32.mxu0 0.0
    %1194 = vmatmul.mubr.f32.gmra.mxu0 %v711
    %v1195 = vpop.f32.mrf.mxu0
    %v1196 = vadd.f32 0.0, %v1195
    %v1197 = vpop.f32.mrf.mxu0
    %1198 = vmatprep.mubr.f32.mxu0 0.0
    %1199 = vmatmul.mubr.f32.gmra.mxu0 %v714
    %v1200 = vpop.f32.mrf.mxu0
    %v1201 = vadd.f32 0.0, %v1200
    %v1202 = vpop.f32.mrf.mxu0
    %1203 = vdwg.mxu0
    %s1204 = sld [smem:[#allocation2 + $0x1]]
    %v1205 = vstv %s1204
    %v1206 = vmul.f32 %v1205, %v1038
    %v1207 = vmul.f32 %v1205, %v1039
    %v1208 = vadd.f32 %v1206, %v1196
    %v1209 = vadd.f32 %v1207, %v1201
    %s1210 = scalar_lea.vmem [#allocation13], 128
    %v1211 = vld [vmem:[%s1210] sm:$0xff]
    %v1212 = vld [vmem:[%s1210 + $0x8] sm:$0xff]
    %v1213 = vld [vmem:[%s1210 + $0x10] sm:$0xff]
    %v1214 = vld [vmem:[%s1210 + $0x18] sm:$0xff]
    %v1215 = vld [vmem:[%s1210 + $0x20] sm:$0xff]
    %v1216 = vld [vmem:[%s1210 + $0x28] sm:$0xff]
    %v1217 = vld [vmem:[%s1210 + $0x30] sm:$0xff]
    %v1218 = vld [vmem:[%s1210 + $0x38] sm:$0xff]
    %v1219 = vld [vmem:[%s1210 + $0x40] sm:$0xff]
    %v1220 = vld [vmem:[%s1210 + $0x48] sm:$0xff]
    %v1221 = vld [vmem:[%s1210 + $0x50] sm:$0xff]
    %v1222 = vld [vmem:[%s1210 + $0x58] sm:$0xff]
    %v1223 = vld [vmem:[%s1210 + $0x60] sm:$0xff]
    %v1224 = vld [vmem:[%s1210 + $0x68] sm:$0xff]
    %v1225 = vld [vmem:[%s1210 + $0x70] sm:$0xff]
    %v1226 = vld [vmem:[%s1210 + $0x78] sm:$0xff]
    %s1227 = scalar_lea.vmem %s14, 1
    %v1228 = vld [vmem:[%s1227] sm:$0x1]
    %s1229 = scalar_lea.vmem [#allocation15], 128
    %v1230 = vld [vmem:[%s1229] sm:$0xff]
    %v1231 = vld [vmem:[%s1229 + $0x8] sm:$0xff]
    %v1232 = vld [vmem:[%s1229 + $0x10] sm:$0xff]
    %v1233 = vld [vmem:[%s1229 + $0x18] sm:$0xff]
    %v1234 = vld [vmem:[%s1229 + $0x20] sm:$0xff]
    %v1235 = vld [vmem:[%s1229 + $0x28] sm:$0xff]
    %v1236 = vld [vmem:[%s1229 + $0x30] sm:$0xff]
    %v1237 = vld [vmem:[%s1229 + $0x38] sm:$0xff]
    %v1238 = vld [vmem:[%s1229 + $0x40] sm:$0xff]
    %v1239 = vld [vmem:[%s1229 + $0x48] sm:$0xff]
    %v1240 = vld [vmem:[%s1229 + $0x50] sm:$0xff]
    %v1241 = vld [vmem:[%s1229 + $0x58] sm:$0xff]
    %v1242 = vld [vmem:[%s1229 + $0x60] sm:$0xff]
    %v1243 = vld [vmem:[%s1229 + $0x68] sm:$0xff]
    %v1244 = vld [vmem:[%s1229 + $0x70] sm:$0xff]
    %v1245 = vld [vmem:[%s1229 + $0x78] sm:$0xff]
    %s1246 = scalar_lea.vmem %s16, 1
    %v1247 = vld [vmem:[%s1246] sm:$0x1]
    %v1249 = vlaneseq
    %v1250 = vshrl.u32 %v1249, 7
    %v1251 = vsub.s32 0, %v1250
    %v1252 = vrot.slane %v1228, %v1251
    %1254 = vmatprep.subr.mxu0 0.0
    %1255 = vmatpush1.msra.mxu0 %v1226
    %1256 = vmatprep.subr.mxu0 0.0
    %1257 = vmatpush1.msra.mxu0 %v1225
    %1258 = vmatprep.subr.mxu0 0.0
    %1259 = vmatpush1.msra.mxu0 %v1224
    %1260 = vmatprep.subr.mxu0 0.0
    %1261 = vmatpush1.msra.mxu0 %v1223
    %1262 = vmatprep.subr.mxu0 0.0
    %1263 = vmatpush1.msra.mxu0 %v1222
    %1264 = vmatprep.subr.mxu0 0.0
    %1265 = vmatpush1.msra.mxu0 %v1221
    %1266 = vmatprep.subr.mxu0 0.0
    %1267 = vmatpush1.msra.mxu0 %v1220
    %1268 = vmatprep.subr.mxu0 0.0
    %1269 = vmatpush1.msra.mxu0 %v1219
    %1270 = vmatprep.subr.mxu0 0.0
    %1271 = vmatpush1.msra.mxu0 %v1218
    %1272 = vmatprep.subr.mxu0 0.0
    %1273 = vmatpush1.msra.mxu0 %v1217
    %1274 = vmatprep.subr.mxu0 0.0
    %1275 = vmatpush1.msra.mxu0 %v1216
    %1276 = vmatprep.subr.mxu0 0.0
    %1277 = vmatpush1.msra.mxu0 %v1215
    %1278 = vmatprep.subr.mxu0 0.0
    %1279 = vmatpush1.msra.mxu0 %v1214
    %1280 = vmatprep.subr.mxu0 0.0
    %1281 = vmatpush1.msra.mxu0 %v1213
    %1282 = vmatprep.subr.mxu0 0.0
    %1283 = vmatpush1.msra.mxu0 %v1212
    %1284 = vmatprep.subr.mxu0 0.0
    %1285 = vmatpush1.msra.mxu0 %v1211
    %1286 = vmatprep.subr.mxu0 0.0
    %1287 = vmatpush2.msra.mxu0 0.0
    %1288 = vmatprep.subr.mxu0 0.0
    %1289 = vmatpush2.msra.mxu0 0.0
    %1290 = vmatprep.subr.mxu0 0.0
    %1291 = vmatpush2.msra.mxu0 0.0
    %1292 = vmatprep.subr.mxu0 0.0
    %1293 = vmatpush2.msra.mxu0 0.0
    %1294 = vmatprep.subr.mxu0 0.0
    %1295 = vmatpush2.msra.mxu0 0.0
    %1296 = vmatprep.subr.mxu0 0.0
    %1297 = vmatpush2.msra.mxu0 0.0
    %1298 = vmatprep.subr.mxu0 0.0
    %1299 = vmatpush2.msra.mxu0 0.0
    %1300 = vmatprep.subr.mxu0 0.0
    %1301 = vmatpush2.msra.mxu0 0.0
    %1302 = vmatprep.subr.mxu0 0.0
    %1303 = vmatpush2.msra.mxu0 0.0
    %1304 = vmatprep.subr.mxu0 0.0
    %1305 = vmatpush2.msra.mxu0 0.0
    %1306 = vmatprep.subr.mxu0 0.0
    %1307 = vmatpush2.msra.mxu0 0.0
    %1308 = vmatprep.subr.mxu0 0.0
    %1309 = vmatpush2.msra.mxu0 0.0
    %1310 = vmatprep.subr.mxu0 0.0
    %1311 = vmatpush2.msra.mxu0 0.0
    %1312 = vmatprep.subr.mxu0 0.0
    %1313 = vmatpush2.msra.mxu0 0.0
    %1314 = vmatprep.subr.mxu0 0.0
    %1315 = vmatpush2.msra.mxu0 0.0
    %1316 = vmatprep.subr.mxu0 0.0
    %1317 = vmatpush2.msra.mxu0 0.0
    %1318 = vmatprep.mubr.f32.mxu0 0.0
    %1319 = vmatmul.mubr.f32.gmra.mxu0 %v1208
    %v1320 = vpop.f32.mrf.mxu0
    %v1321 = vadd.f32 %v1252, %v1320
    %v1322 = vpop.f32.mrf.mxu0
    %1323 = vmatprep.mubr.f32.mxu0 0.0
    %1324 = vmatmul.mubr.f32.gmra.mxu0 %v1209
    %v1325 = vpop.f32.mrf.mxu0
    %v1326 = vadd.f32 %v1252, %v1325
    %v1327 = vpop.f32.mrf.mxu0
    %1328 = vdwg.mxu0
    %v1329 = vmax.f32 %v1321, 0.0
    %v1330 = vmax.f32 %v1326, 0.0
    %v1332 = vlaneseq
    %v1333 = vshrl.u32 %v1332, 7
    %v1334 = vsub.s32 0, %v1333
    %v1335 = vrot.slane %v1247, %v1334
    %1337 = vmatprep.subr.mxu0 0.0
    %1338 = vmatpush1.msra.mxu0 %v1245
    %1339 = vmatprep.subr.mxu0 0.0
    %1340 = vmatpush1.msra.mxu0 %v1244
    %1341 = vmatprep.subr.mxu0 0.0
    %1342 = vmatpush1.msra.mxu0 %v1243
    %1343 = vmatprep.subr.mxu0 0.0
    %1344 = vmatpush1.msra.mxu0 %v1242
    %1345 = vmatprep.subr.mxu0 0.0
    %1346 = vmatpush1.msra.mxu0 %v1241
    %1347 = vmatprep.subr.mxu0 0.0
    %1348 = vmatpush1.msra.mxu0 %v1240
    %1349 = vmatprep.subr.mxu0 0.0
    %1350 = vmatpush1.msra.mxu0 %v1239
    %1351 = vmatprep.subr.mxu0 0.0
    %1352 = vmatpush1.msra.mxu0 %v1238
    %1353 = vmatprep.subr.mxu0 0.0
    %1354 = vmatpush1.msra.mxu0 %v1237
    %1355 = vmatprep.subr.mxu0 0.0
    %1356 = vmatpush1.msra.mxu0 %v1236
    %1357 = vmatprep.subr.mxu0 0.0
    %1358 = vmatpush1.msra.mxu0 %v1235
    %1359 = vmatprep.subr.mxu0 0.0
    %1360 = vmatpush1.msra.mxu0 %v1234
    %1361 = vmatprep.subr.mxu0 0.0
    %1362 = vmatpush1.msra.mxu0 %v1233
    %1363 = vmatprep.subr.mxu0 0.0
    %1364 = vmatpush1.msra.mxu0 %v1232
    %1365 = vmatprep.subr.mxu0 0.0
    %1366 = vmatpush1.msra.mxu0 %v1231
    %1367 = vmatprep.subr.mxu0 0.0
    %1368 = vmatpush1.msra.mxu0 %v1230
    %1369 = vmatprep.subr.mxu0 0.0
    %1370 = vmatpush2.msra.mxu0 0.0
    %1371 = vmatprep.subr.mxu0 0.0
    %1372 = vmatpush2.msra.mxu0 0.0
    %1373 = vmatprep.subr.mxu0 0.0
    %1374 = vmatpush2.msra.mxu0 0.0
    %1375 = vmatprep.subr.mxu0 0.0
    %1376 = vmatpush2.msra.mxu0 0.0
    %1377 = vmatprep.subr.mxu0 0.0
    %1378 = vmatpush2.msra.mxu0 0.0
    %1379 = vmatprep.subr.mxu0 0.0
    %1380 = vmatpush2.msra.mxu0 0.0
    %1381 = vmatprep.subr.mxu0 0.0
    %1382 = vmatpush2.msra.mxu0 0.0
    %1383 = vmatprep.subr.mxu0 0.0
    %1384 = vmatpush2.msra.mxu0 0.0
    %1385 = vmatprep.subr.mxu0 0.0
    %1386 = vmatpush2.msra.mxu0 0.0
    %1387 = vmatprep.subr.mxu0 0.0
    %1388 = vmatpush2.msra.mxu0 0.0
    %1389 = vmatprep.subr.mxu0 0.0
    %1390 = vmatpush2.msra.mxu0 0.0
    %1391 = vmatprep.subr.mxu0 0.0
    %1392 = vmatpush2.msra.mxu0 0.0
    %1393 = vmatprep.subr.mxu0 0.0
    %1394 = vmatpush2.msra.mxu0 0.0
    %1395 = vmatprep.subr.mxu0 0.0
    %1396 = vmatpush2.msra.mxu0 0.0
    %1397 = vmatprep.subr.mxu0 0.0
    %1398 = vmatpush2.msra.mxu0 0.0
    %1399 = vmatprep.subr.mxu0 0.0
    %1400 = vmatpush2.msra.mxu0 0.0
    %1401 = vmatprep.mubr.f32.mxu0 0.0
    %1402 = vmatmul.mubr.f32.gmra.mxu0 %v1329
    %v1403 = vpop.f32.mrf.mxu0
    %v1404 = vadd.f32 %v1335, %v1403
    %v1405 = vpop.f32.mrf.mxu0
    %1406 = vmatprep.mubr.f32.mxu0 0.0
    %1407 = vmatmul.mubr.f32.gmra.mxu0 %v1330
    %v1408 = vpop.f32.mrf.mxu0
    %v1409 = vadd.f32 %v1335, %v1408
    %v1410 = vpop.f32.mrf.mxu0
    %1411 = vdwg.mxu0
    %s1412 = scalar_lea.vmem %s17, 1
    %v1413 = vld [vmem:[%s1412] sm:$0x1]
    %s1414 = scalar_lea.vmem %s18, 1
    %v1415 = vld [vmem:[%s1414] sm:$0x1]
    %v1416 = vadd.f32 %v1404, %v1409
    %v1417 = vrot.slane %v1416, 4
    %v1418 = vadd.f32 %v1416, %v1417
    %v1419 = vrot.slane %v1418, 2
    %v1420 = vadd.f32 %v1418, %v1419
    %v1421 = vrot.slane %v1420, 1
    %v1422 = vadd.f32 %v1420, %v1421
    %v1423 = vmul.f32 %v1422, %v1004
    %v1424 = vsub.f32 %v1404, %v1423
    %v1425 = vsub.f32 %v1409, %v1423
    %v1426 = vmul.f32 %v1424, %v1424
    %v1427 = vmul.f32 %v1425, %v1425
    %v1428 = vadd.f32 %v1426, %v1427
    %v1429 = vrot.slane %v1428, 4
    %v1430 = vadd.f32 %v1428, %v1429
    %v1431 = vrot.slane %v1430, 2
    %v1432 = vadd.f32 %v1430, %v1431
    %v1433 = vrot.slane %v1432, 1
    %v1434 = vadd.f32 %v1432, %v1433
    %v1435 = vmul.f32 %v1434, %v1004
    %v1436 = vadd.f32 %v1435, 1e-05
    %v1437 = vrsqrt.pop %v1436
    %v1438 = vmul.f32 %v1424, %v1437
    %v1439 = vmul.f32 %v1425, %v1437
    %v1441 = vlaneseq
    %v1442 = vshrl.u32 %v1441, 7
    %v1443 = vsub.s32 0, %v1442
    %v1444 = vrot.slane %v1413, %v1443
    %v1446 = vmul.f32 %v1438, %v1444
    %v1447 = vmul.f32 %v1439, %v1444
    %v1449 = vlaneseq
    %v1450 = vshrl.u32 %v1449, 7
    %v1451 = vsub.s32 0, %v1450
    %v1452 = vrot.slane %v1415, %v1451
    %v1454 = vadd.f32 %v1446, %v1452
    %v1455 = vadd.f32 %v1447, %v1452
    %1456 = vst [vmem:[#allocation16] sm:$0xff] %v1454
    %1457 = vst [vmem:[#allocation16 + $0x8] sm:$0xff] %v1455
    // Predicated region
    $region110: #{tpu_custom_call.1} parent=1 // pred_check
      _
    $region111: #{tpu_custom_call.1} parent=1 // pred_check_branch
      %1459 = sbr.rel (0) target = $region113
    $region112: #{tpu_custom_call.1} parent=1 // pred_region
      %s1461 = ssub.s32 256, 256
      %1462 = vsyncadd [#allocation4], %s1461
      %s1463 = sshll.u32 [#allocation16], 4
      %s1464 = int_to_ptr.vmem [resolvable:$true] %s1463
      %1469 = dma.vmem_to_hbm [thread:$0]  %s1464, 256, %s19, [#allocation4], 128, 128, 8
    $region113: #{tpu_custom_call.1} parent=1 // pred_fallthru
      _
    // Predicated region
    $region114: #{tpu_custom_call.1} parent=1 // pred_check
      _
    $region115: #{tpu_custom_call.1} parent=1 // pred_check_branch
      %1471 = sbr.rel (0) target = $region117
    $region116: #{tpu_custom_call.1} parent=1 // pred_region
      %1472 = dma.done [#allocation4], 256
    $region117: #{tpu_custom_call.1} parent=1 // pred_fallthru
      _
    %1473 = vsyncpa [#allocation3], 1
    %1474 = vsyncpa [#allocation8], 1
    %1475 = vsyncpa [#allocation11], 1
    %1476 = vsyncpa [#allocation14], 1
    %1477 = vsyncpa [#allocation4], 1
    %1478 = vsyncpa [#allocation5], 1

</llo_original>
